<compile_context>
chip_gen: v7x
topology: tpu7x:2x2x1
jax: 0.10.0
libtpu: 0.0.40
codegen_flags: <defaults>
</compile_context>

<pallas_src>
import functools

import jax
import jax.numpy as jnp
import numpy as np
from jax.experimental import pallas as pl
from jax.experimental.pallas import tpu as pltpu

K = 9              # conv kernel size
PAD = 4            # reflect padding per conv
HALO = 2 * PAD     # pooled-domain halo needed by the fused conv1+conv2 pair
BN_EPS = 1e-5


def _cdiv(a, b):
    return -(-a // b)


# ------------------------------ Pallas kernel ------------------------------ #

def _fused_conv_kernel(x_ref, w1_ref, s1_ref, w2_ref, s2_ref, o_ref, y1_ref, *,
                       last_valid):
    # x_ref  : (Cin, tlh + 2*HALO)  pooled + halo-padded input window (compute dtype)
    # w1_ref : (K, Cout, Cin)       conv1 weights, BN scale folded (compute dtype)
    # s1_ref : (Cout, 1)            conv1 folded bias/BN shift (f32)
    # w2_ref : (K, Cout, Cout)      conv2 weights, BN scale folded (compute dtype)
    # s2_ref : (Cout, 1)            conv2 folded bias/BN shift (f32)
    # o_ref  : (Cout, tlh)          output tile
    # y1_ref : (Cout, tlh + K - 1)  conv1 output incl. +-PAD halo columns (scratch)
    # last_valid: number of valid output columns in the last L-tile (static Python int)
    j = pl.program_id(1)
    cout, tlh = o_ref.shape
    e = tlh + K - 1                       # conv1 tile length incl. halo columns
    cdt = y1_ref.dtype                    # MXU compute dtype (bf16 fast / f32 exact)

    # ---- conv1 (+ folded BN scale) + ReLU: K accumulating MXU dots ------------
    # Per-tap ref slices feed the MXU directly (no im2col slab, no full-window
    # value materialization); accumulation stays in f32.
    acc1 = jnp.dot(w1_ref[0], x_ref[:, 0:e], preferred_element_type=jnp.float32)
    for t in range(1, K):                                           # static unroll
        acc1 = acc1 + jnp.dot(w1_ref[t], x_ref[:, t:t + e],
                              preferred_element_type=jnp.float32)
    # NOTE: on the bf16 fast path y1 is quantized to bf16 here (intentional; see
    # loose tolerance).  Use compute_dtype=jnp.float32 for the exact path.
    y1_ref[...] = jnp.maximum(acc1 + s1_ref[...], 0.0).astype(cdt)

    # ---- reflect conv1's output across the *global* signal edges (edge tiles) --
    @pl.when(j == 0)
    def _():
        src = y1_ref[:, PAD + 1:2 * PAD + 1]          # y1 at positions 1..PAD
        for t in range(1, PAD + 1):                   # y1[-t] <- y1[t]
            y1_ref[:, PAD - t:PAD - t + 1] = src[:, t - 1:t]

    @pl.when(j == pl.num_programs(1) - 1)
    def _():
        lo = last_valid - 1
        src = y1_ref[:, lo:lo + PAD]                  # y1 at Lh-1-PAD .. Lh-2
        for t in range(1, PAD + 1):                   # y1[Lh-1+t] <- y1[Lh-1-t]
            c = PAD + lo + t
            y1_ref[:, c:c + 1] = src[:, PAD - t:PAD - t + 1]

    # ---- conv2 (+ folded BN scale) + ReLU, same K-dot scheme -------------------
    acc2 = jnp.dot(w2_ref[0], y1_ref[:, 0:tlh], preferred_element_type=jnp.float32)
    for t in range(1, K):
        acc2 = acc2 + jnp.dot(w2_ref[t], y1_ref[:, t:t + tlh],
                              preferred_element_type=jnp.float32)
    o_ref[...] = jnp.maximum(acc2 + s2_ref[...], 0.0).astype(o_ref.dtype)


# ------------------------------ Host wrappers ------------------------------ #

def _fold_conv_bn(p, compute_dtype):
    """Fold conv bias + eval-mode BatchNorm into per-tap weights and a channel shift."""
    w = p["w"].astype(jnp.float32)                        # (Cout, Cin, K)
    scale = p["gamma"] / jnp.sqrt(p["var"] + BN_EPS)      # (Cout,)
    shift = (p["b"] - p["mean"]) * scale + p["beta"]      # (Cout,)
    wk = (w * scale[:, None, None]).transpose(2, 0, 1)    # (K, Cout, Cin), tap-major
    return wk.astype(compute_dtype), shift[:, None].astype(jnp.float32)


def _pick_l_tile(lh, max_tile, n_batch):
    """Output L-tile: lane-dense (multiple of 128) when tiled.  Aims for >= 2 tiles
    when the batch axis alone cannot feed a 2nd TensorCore (v7x megacore), and keeps
    the last tile's valid remainder >= PAD so neighbouring tiles never read
    un-reflected halo columns."""
    if lh <= 128:
        return lh, 1
    t = max(128, (max_tile // 128) * 128)
    t = min(t, 128 * _cdiv(lh, 128))                 # at most one tile of padding
    if n_batch < 2:
        t = min(t, max(128, 128 * (_cdiv(lh, 128) // 2)))
    while _cdiv(lh, t) > 1 and lh - (_cdiv(lh, t) - 1) * t < PAD:
        t += 128                                     # keep last-tile remainder >= PAD
    return t, _cdiv(lh, t)


@functools.partial(jax.jit,
                   static_argnames=("compute_dtype", "out_dtype", "max_l_tile"))
def unet_down(x, params, *, compute_dtype=jnp.bfloat16, out_dtype=None,
              max_l_tile=512):
    """UNetDown.forward: MaxPool1d(2) -> [Conv1d(k=9,reflect pad 4)+BN(eval)+ReLU] x2."""
    N, Cin, L = x.shape
    Lh = L // 2
    if Lh < PAD + 1:
        raise ValueError("pooled length must be >= 5 for reflect padding of 4")
    Cout = params["conv1"]["w"].shape[0]
    out_dtype = x.dtype if out_dtype is None else out_dtype

    # Host prologue (fused lane-dense XLA pass): MaxPool1d(2), cast to the MXU compute
    # dtype (halves the input DMA stream), reflect pad by PAD (the true conv1 boundary
    # condition) + edge pad by PAD (outer halo; those columns only feed y1 halo
    # positions that the kernel overwrites by reflection).
    pooled = jnp.maximum(x[:, :, 0:2 * Lh:2],
                         x[:, :, 1:2 * Lh:2]).astype(compute_dtype)       # (N,Cin,Lh)
    xp = jnp.pad(pooled, ((0, 0), (0, 0), (PAD, PAD)), mode="reflect")
    xp = jnp.pad(xp, ((0, 0), (0, 0), (PAD, PAD)), mode="edge")           # (N,Cin,Lh+16)

    tlh, n_t = _pick_l_tile(Lh, max_l_tile, N)
    lh_pad = n_t * tlh
    wlen = tlh + 2 * HALO
    last_valid = Lh - (n_t - 1) * tlh

    # Overlapped halo windows, one per L-tile: (N, n_t, Cin, tlh + 2*HALO).
    # Per-grid-step VMEM is bounded regardless of sequence length (v7x-safe).
    idx = jnp.arange(n_t)[:, None] * tlh + jnp.arange(wlen)[None, :]
    idx = jnp.minimum(idx, Lh + 2 * HALO - 1)        # clamp the padded tail
    xt = jnp.transpose(xp[:, :, idx], (0, 2, 1, 3))

    # Fold conv bias + eval BN into per-tap weights / per-channel shifts.
    w1, s1 = _fold_conv_bn(params["conv1"], compute_dtype)   # (K,Cout,Cin), (Cout,1)
    w2, s2 = _fold_conv_bn(params["conv2"], compute_dtype)   # (K,Cout,Cout), (Cout,1)

    # Explicit VMEM budget: double-buffered input/output tile + single-buffered
    # constants + y1 scratch, with 2x headroom, never below the 32 MiB default.
    cb = jnp.dtype(compute_dtype).itemsize
    ob = jnp.dtype(out_dtype).itemsize
    est = (2 * Cin * wlen * cb + (w1.size + w2.size) * cb + 2 * Cout * 4
           + 2 * Cout * tlh * ob + Cout * (tlh + K - 1) * cb)
    vmem_limit = int(min(64 << 20, max(32 << 20, 2 * est)))

    const = dict(pipeline_mode=pl.Buffered(1))       # grid-invariant operands: 1 buffer
    out = pl.pallas_call(
        functools.partial(_fused_conv_kernel, last_valid=last_valid),
        out_shape=jax.ShapeDtypeStruct((N, Cout, lh_pad), out_dtype),
        grid=(N, n_t),
        in_specs=[
            pl.BlockSpec((None, None, Cin, wlen), lambda n, j: (n, j, 0, 0)),
            pl.BlockSpec((K, Cout, Cin), lambda n, j: (0, 0, 0), **const),
            pl.BlockSpec((Cout, 1), lambda n, j: (0, 0), **const),
            pl.BlockSpec((K, Cout, Cout), lambda n, j: (0, 0, 0), **const),
            pl.BlockSpec((Cout, 1), lambda n, j: (0, 0), **const),
        ],
        out_specs=pl.BlockSpec((None, Cout, tlh), lambda n, j: (n, 0, j)),
        scratch_shapes=[pltpu.VMEM((Cout, tlh + K - 1), compute_dtype)],
        compiler_params=pltpu.CompilerParams(
            dimension_semantics=("parallel", "parallel"),
            vmem_limit_bytes=vmem_limit),
    )(xt, w1, s1, w2, s2)
    return out if lh_pad == Lh else out[:, :, :Lh]


# ------------------------- pure-JAX reference model ------------------------ #

def _ref_unet_down(x, params):
    N, C, L = x.shape
    x = jnp.max(x[:, :, : L // 2 * 2].reshape(N, C, L // 2, 2), axis=-1)
    for p in (params["conv1"], params["conv2"]):
        xpad = jnp.pad(x, ((0, 0), (0, 0), (PAD, PAD)), mode="reflect")
        y = jax.lax.conv_general_dilated(
            xpad, p["w"], window_strides=(1,), padding="VALID",
            dimension_numbers=("NCH", "OIH", "NCH"))
        y = y + p["b"][None, :, None]
        y = (y - p["mean"][None, :, None]) / jnp.sqrt(p["var"][None, :, None] + BN_EPS)
        y = y * p["gamma"][None, :, None] + p["beta"][None, :, None]
        x = jax.nn.relu(y)
    return x


# --------------------------------- main ------------------------------------ #

def _make_params(key, in_channels, out_channels):
    def conv_block(k, cin, cout):
        kw, kb, kg, kbt, km, kv = jax.random.split(k, 6)
        return {
            "w": 0.1 * jax.random.normal(kw, (cout, cin, K), jnp.float32),
            "b": 0.05 * jax.random.normal(kb, (cout,), jnp.float32),
            "gamma": 1.0 + 0.1 * jax.random.normal(kg, (cout,), jnp.float32),
            "beta": 0.1 * jax.random.normal(kbt, (cout,), jnp.float32),
            "mean": 0.1 * jax.random.normal(km, (cout,), jnp.float32),
            "var": jnp.abs(jax.random.normal(kv, (cout,), jnp.float32)) + 0.5,
        }
    k1, k2 = jax.random.split(key)
    return {"conv1": conv_block(k1, in_channels, out_channels),
            "conv2": conv_block(k2, out_channels, out_channels)}


if __name__ == "__main__":
    key = jax.random.PRNGKey(0)
    kx, kp, kx2 = jax.random.split(key, 3)

    N, Cin, Cout, L = 2, 4, 8, 32                # NCL input; pooled length = 16
    x = jax.random.normal(kx, (N, Cin, L), jnp.float32)
    params = _make_params(kp, Cin, Cout)

    ref = jax.block_until_ready(_ref_unet_down(x, params))

    # Exact path (f32 MXU operands): tight tolerance against the f32 reference.
    out_f32 = jax.block_until_ready(unet_down(x, params, compute_dtype=jnp.float32))
    assert out_f32.shape == (N, Cout, L // 2), out_f32.shape
    np.testing.assert_allclose(np.asarray(out_f32), np.asarray(ref), rtol=1e-4, atol=1e-5)

    # Fast path (bf16 MXU operands, f32 accumulation / epilogue): loose tolerance.
    out_bf16 = jax.block_until_ready(unet_down(x, params, compute_dtype=jnp.bfloat16))
    assert out_bf16.shape == (N, Cout, L // 2), out_bf16.shape
    np.testing.assert_allclose(np.asarray(out_bf16), np.asarray(ref), rtol=5e-2, atol=5e-2)

    # Multi-tile path: N=1 (>= 2 L-tiles for megacore), interior tiles, padded last tile.
    x2 = jax.random.normal(kx2, (1, Cin, 600), jnp.float32)
    ref2 = jax.block_until_ready(_ref_unet_down(x2, params))
    out2 = jax.block_until_ready(
        unet_down(x2, params, compute_dtype=jnp.float32, max_l_tile=256))
    assert out2.shape == (1, Cout, 300), out2.shape
    np.testing.assert_allclose(np.asarray(out2), np.asarray(ref2), rtol=1e-4, atol=1e-5)

    print("KERNEL_OK")
</pallas_src>

<mosaic_0001>
module attributes {stable_mosaic.version = 11 : i64} {
  func.func @_fused_conv_kernel(%arg0: i32, %arg1: i32, %arg2: memref<1x1x4x32xf32, #tpu.memory_space<vmem>>, %arg3: memref<9x8x4xf32, #tpu.memory_space<vmem>>, %arg4: memref<8x1xf32, #tpu.memory_space<vmem>>, %arg5: memref<9x8x8xf32, #tpu.memory_space<vmem>>, %arg6: memref<8x1xf32, #tpu.memory_space<vmem>>, %arg7: memref<1x8x16xf32, #tpu.memory_space<vmem>>, %arg8: memref<8x24xf32, #tpu.memory_space<vmem>>) attributes {dimension_semantics = [#tpu.dimension_semantics<parallel>, #tpu.dimension_semantics<parallel>], iteration_bounds = array<i64: 2, 1>, scalar_prefetch = 0 : i64, scratch_operands = 1 : i64, tpu.core_type = #tpu.core_type<tc>, window_params = [{transform_indices = @transform_0, window_bounds = array<i64: 1, 1, 4, 32>}, {pipeline_mode = #tpu.pipeline_mode<synchronous>, transform_indices = @transform_1, window_bounds = array<i64: 9, 8, 4>}, {pipeline_mode = #tpu.pipeline_mode<synchronous>, transform_indices = @transform_2, window_bounds = array<i64: 8, 1>}, {pipeline_mode = #tpu.pipeline_mode<synchronous>, transform_indices = @transform_3, window_bounds = array<i64: 9, 8, 8>}, {pipeline_mode = #tpu.pipeline_mode<synchronous>, transform_indices = @transform_4, window_bounds = array<i64: 8, 1>}, {transform_indices = @transform_5, window_bounds = array<i64: 1, 8, 16>}]} {
    %c0 = arith.constant 0 : index
    %c0_0 = arith.constant 0 : index
    %c0_1 = arith.constant 0 : index
    %0 = vector.load %arg3[%c0, %c0_0, %c0_1] : memref<9x8x4xf32, #tpu.memory_space<vmem>>, vector<1x8x4xf32>
    %1 = vector.shape_cast %0 : vector<1x8x4xf32> to vector<8x4xf32>
    %c0_2 = arith.constant 0 : index
    %c0_3 = arith.constant 0 : index
    %c0_4 = arith.constant 0 : index
    %c0_5 = arith.constant 0 : index
    %2 = vector.load %arg2[%c0_2, %c0_3, %c0_4, %c0_5] : memref<1x1x4x32xf32, #tpu.memory_space<vmem>>, vector<1x1x4x24xf32>
    %3 = vector.shape_cast %2 : vector<1x1x4x24xf32> to vector<4x24xf32>
    %cst = arith.constant dense<0.000000e+00> : vector<8x24xf32>
    %4 = tpu.matmul %1, %3, %cst {dimension_numbers = #tpu.dot_dimension_numbers<[1], [0], [0], [1], [0, 0, 1, 1], [], []>} : vector<8x4xf32>, vector<4x24xf32>, vector<8x24xf32> -> vector<8x24xf32>
    %c1 = arith.constant 1 : index
    %c0_6 = arith.constant 0 : index
    %c0_7 = arith.constant 0 : index
    %5 = vector.load %arg3[%c1, %c0_6, %c0_7] : memref<9x8x4xf32, #tpu.memory_space<vmem>>, vector<1x8x4xf32>
    %6 = vector.shape_cast %5 : vector<1x8x4xf32> to vector<8x4xf32>
    %c0_8 = arith.constant 0 : index
    %c0_9 = arith.constant 0 : index
    %c0_10 = arith.constant 0 : index
    %c1_11 = arith.constant 1 : index
    %7 = vector.load %arg2[%c0_8, %c0_9, %c0_10, %c1_11] : memref<1x1x4x32xf32, #tpu.memory_space<vmem>>, vector<1x1x4x24xf32>
    %8 = vector.shape_cast %7 : vector<1x1x4x24xf32> to vector<4x24xf32>
    %cst_12 = arith.constant dense<0.000000e+00> : vector<8x24xf32>
    %9 = tpu.matmul %6, %8, %cst_12 {dimension_numbers = #tpu.dot_dimension_numbers<[1], [0], [0], [1], [0, 0, 1, 1], [], []>} : vector<8x4xf32>, vector<4x24xf32>, vector<8x24xf32> -> vector<8x24xf32>
    %10 = arith.addf %4, %9 : vector<8x24xf32>
    %c2 = arith.constant 2 : index
    %c0_13 = arith.constant 0 : index
    %c0_14 = arith.constant 0 : index
    %11 = vector.load %arg3[%c2, %c0_13, %c0_14] : memref<9x8x4xf32, #tpu.memory_space<vmem>>, vector<1x8x4xf32>
    %12 = vector.shape_cast %11 : vector<1x8x4xf32> to vector<8x4xf32>
    %c0_15 = arith.constant 0 : index
    %c0_16 = arith.constant 0 : index
    %c0_17 = arith.constant 0 : index
    %c2_18 = arith.constant 2 : index
    %13 = vector.load %arg2[%c0_15, %c0_16, %c0_17, %c2_18] : memref<1x1x4x32xf32, #tpu.memory_space<vmem>>, vector<1x1x4x24xf32>
    %14 = vector.shape_cast %13 : vector<1x1x4x24xf32> to vector<4x24xf32>
    %cst_19 = arith.constant dense<0.000000e+00> : vector<8x24xf32>
    %15 = tpu.matmul %12, %14, %cst_19 {dimension_numbers = #tpu.dot_dimension_numbers<[1], [0], [0], [1], [0, 0, 1, 1], [], []>} : vector<8x4xf32>, vector<4x24xf32>, vector<8x24xf32> -> vector<8x24xf32>
    %16 = arith.addf %10, %15 : vector<8x24xf32>
    %c3 = arith.constant 3 : index
    %c0_20 = arith.constant 0 : index
    %c0_21 = arith.constant 0 : index
    %17 = vector.load %arg3[%c3, %c0_20, %c0_21] : memref<9x8x4xf32, #tpu.memory_space<vmem>>, vector<1x8x4xf32>
    %18 = vector.shape_cast %17 : vector<1x8x4xf32> to vector<8x4xf32>
    %c0_22 = arith.constant 0 : index
    %c0_23 = arith.constant 0 : index
    %c0_24 = arith.constant 0 : index
    %c3_25 = arith.constant 3 : index
    %19 = vector.load %arg2[%c0_22, %c0_23, %c0_24, %c3_25] : memref<1x1x4x32xf32, #tpu.memory_space<vmem>>, vector<1x1x4x24xf32>
    %20 = vector.shape_cast %19 : vector<1x1x4x24xf32> to vector<4x24xf32>
    %cst_26 = arith.constant dense<0.000000e+00> : vector<8x24xf32>
    %21 = tpu.matmul %18, %20, %cst_26 {dimension_numbers = #tpu.dot_dimension_numbers<[1], [0], [0], [1], [0, 0, 1, 1], [], []>} : vector<8x4xf32>, vector<4x24xf32>, vector<8x24xf32> -> vector<8x24xf32>
    %22 = arith.addf %16, %21 : vector<8x24xf32>
    %c4 = arith.constant 4 : index
    %c0_27 = arith.constant 0 : index
    %c0_28 = arith.constant 0 : index
    %23 = vector.load %arg3[%c4, %c0_27, %c0_28] : memref<9x8x4xf32, #tpu.memory_space<vmem>>, vector<1x8x4xf32>
    %24 = vector.shape_cast %23 : vector<1x8x4xf32> to vector<8x4xf32>
    %c0_29 = arith.constant 0 : index
    %c0_30 = arith.constant 0 : index
    %c0_31 = arith.constant 0 : index
    %c4_32 = arith.constant 4 : index
    %25 = vector.load %arg2[%c0_29, %c0_30, %c0_31, %c4_32] : memref<1x1x4x32xf32, #tpu.memory_space<vmem>>, vector<1x1x4x24xf32>
    %26 = vector.shape_cast %25 : vector<1x1x4x24xf32> to vector<4x24xf32>
    %cst_33 = arith.constant dense<0.000000e+00> : vector<8x24xf32>
    %27 = tpu.matmul %24, %26, %cst_33 {dimension_numbers = #tpu.dot_dimension_numbers<[1], [0], [0], [1], [0, 0, 1, 1], [], []>} : vector<8x4xf32>, vector<4x24xf32>, vector<8x24xf32> -> vector<8x24xf32>
    %28 = arith.addf %22, %27 : vector<8x24xf32>
    %c5 = arith.constant 5 : index
    %c0_34 = arith.constant 0 : index
    %c0_35 = arith.constant 0 : index
    %29 = vector.load %arg3[%c5, %c0_34, %c0_35] : memref<9x8x4xf32, #tpu.memory_space<vmem>>, vector<1x8x4xf32>
    %30 = vector.shape_cast %29 : vector<1x8x4xf32> to vector<8x4xf32>
    %c0_36 = arith.constant 0 : index
    %c0_37 = arith.constant 0 : index
    %c0_38 = arith.constant 0 : index
    %c5_39 = arith.constant 5 : index
    %31 = vector.load %arg2[%c0_36, %c0_37, %c0_38, %c5_39] : memref<1x1x4x32xf32, #tpu.memory_space<vmem>>, vector<1x1x4x24xf32>
    %32 = vector.shape_cast %31 : vector<1x1x4x24xf32> to vector<4x24xf32>
    %cst_40 = arith.constant dense<0.000000e+00> : vector<8x24xf32>
    %33 = tpu.matmul %30, %32, %cst_40 {dimension_numbers = #tpu.dot_dimension_numbers<[1], [0], [0], [1], [0, 0, 1, 1], [], []>} : vector<8x4xf32>, vector<4x24xf32>, vector<8x24xf32> -> vector<8x24xf32>
    %34 = arith.addf %28, %33 : vector<8x24xf32>
    %c6 = arith.constant 6 : index
    %c0_41 = arith.constant 0 : index
    %c0_42 = arith.constant 0 : index
    %35 = vector.load %arg3[%c6, %c0_41, %c0_42] : memref<9x8x4xf32, #tpu.memory_space<vmem>>, vector<1x8x4xf32>
    %36 = vector.shape_cast %35 : vector<1x8x4xf32> to vector<8x4xf32>
    %c0_43 = arith.constant 0 : index
    %c0_44 = arith.constant 0 : index
    %c0_45 = arith.constant 0 : index
    %c6_46 = arith.constant 6 : index
    %37 = vector.load %arg2[%c0_43, %c0_44, %c0_45, %c6_46] : memref<1x1x4x32xf32, #tpu.memory_space<vmem>>, vector<1x1x4x24xf32>
    %38 = vector.shape_cast %37 : vector<1x1x4x24xf32> to vector<4x24xf32>
    %cst_47 = arith.constant dense<0.000000e+00> : vector<8x24xf32>
    %39 = tpu.matmul %36, %38, %cst_47 {dimension_numbers = #tpu.dot_dimension_numbers<[1], [0], [0], [1], [0, 0, 1, 1], [], []>} : vector<8x4xf32>, vector<4x24xf32>, vector<8x24xf32> -> vector<8x24xf32>
    %40 = arith.addf %34, %39 : vector<8x24xf32>
    %c7 = arith.constant 7 : index
    %c0_48 = arith.constant 0 : index
    %c0_49 = arith.constant 0 : index
    %41 = vector.load %arg3[%c7, %c0_48, %c0_49] : memref<9x8x4xf32, #tpu.memory_space<vmem>>, vector<1x8x4xf32>
    %42 = vector.shape_cast %41 : vector<1x8x4xf32> to vector<8x4xf32>
    %c0_50 = arith.constant 0 : index
    %c0_51 = arith.constant 0 : index
    %c0_52 = arith.constant 0 : index
    %c7_53 = arith.constant 7 : index
    %43 = vector.load %arg2[%c0_50, %c0_51, %c0_52, %c7_53] : memref<1x1x4x32xf32, #tpu.memory_space<vmem>>, vector<1x1x4x24xf32>
    %44 = vector.shape_cast %43 : vector<1x1x4x24xf32> to vector<4x24xf32>
    %cst_54 = arith.constant dense<0.000000e+00> : vector<8x24xf32>
    %45 = tpu.matmul %42, %44, %cst_54 {dimension_numbers = #tpu.dot_dimension_numbers<[1], [0], [0], [1], [0, 0, 1, 1], [], []>} : vector<8x4xf32>, vector<4x24xf32>, vector<8x24xf32> -> vector<8x24xf32>
    %46 = arith.addf %40, %45 : vector<8x24xf32>
    %c8 = arith.constant 8 : index
    %c0_55 = arith.constant 0 : index
    %c0_56 = arith.constant 0 : index
    %47 = vector.load %arg3[%c8, %c0_55, %c0_56] : memref<9x8x4xf32, #tpu.memory_space<vmem>>, vector<1x8x4xf32>
    %48 = vector.shape_cast %47 : vector<1x8x4xf32> to vector<8x4xf32>
    %c0_57 = arith.constant 0 : index
    %c0_58 = arith.constant 0 : index
    %c0_59 = arith.constant 0 : index
    %c8_60 = arith.constant 8 : index
    %49 = vector.load %arg2[%c0_57, %c0_58, %c0_59, %c8_60] : memref<1x1x4x32xf32, #tpu.memory_space<vmem>>, vector<1x1x4x24xf32>
    %50 = vector.shape_cast %49 : vector<1x1x4x24xf32> to vector<4x24xf32>
    %cst_61 = arith.constant dense<0.000000e+00> : vector<8x24xf32>
    %51 = tpu.matmul %48, %50, %cst_61 {dimension_numbers = #tpu.dot_dimension_numbers<[1], [0], [0], [1], [0, 0, 1, 1], [], []>} : vector<8x4xf32>, vector<4x24xf32>, vector<8x24xf32> -> vector<8x24xf32>
    %52 = arith.addf %46, %51 : vector<8x24xf32>
    %c0_62 = arith.constant 0 : index
    %c0_63 = arith.constant 0 : index
    %53 = vector.load %arg4[%c0_62, %c0_63] : memref<8x1xf32, #tpu.memory_space<vmem>>, vector<8x1xf32>
    %54 = vector.broadcast %53 : vector<8x1xf32> to vector<8x24xf32>
    %55 = arith.addf %52, %54 : vector<8x24xf32>
    %cst_64 = arith.constant 0.000000e+00 : f32
    %56 = vector.broadcast %cst_64 : f32 to vector<8x24xf32>
    %57 = arith.maximumf %55, %56 : vector<8x24xf32>
    %c0_65 = arith.constant 0 : index
    %c0_66 = arith.constant 0 : index
    %58 = vector.load %arg8[%c0_65, %c0_66] : memref<8x24xf32, #tpu.memory_space<vmem>>, vector<8x24xf32>
    tpu.vector_store %arg8[%c0_65, %c0_66], %57 {strides = array<i32>} : memref<8x24xf32, #tpu.memory_space<vmem>>, vector<8x24xf32>,
    %c0_i32 = arith.constant 0 : i32
    %59 = arith.cmpi eq, %arg1, %c0_i32 : i32
    %60 = arith.extui %59 : i1 to i32
    %c0_i32_67 = arith.constant 0 : i32
    %61 = arith.cmpi ne, %60, %c0_i32_67 : i32
    scf.if %61 {
      %c0_130 = arith.constant 0 : index
      %c5_131 = arith.constant 5 : index
      %117 = vector.load %arg8[%c0_130, %c5_131] : memref<8x24xf32, #tpu.memory_space<vmem>>, vector<8x4xf32>
      %118 = vector.extract_strided_slice %117 {offsets = [0, 0], sizes = [8, 1], strides = [1, 1]} : vector<8x4xf32> to vector<8x1xf32>
      %c0_132 = arith.constant 0 : index
      %c3_133 = arith.constant 3 : index
      %119 = vector.load %arg8[%c0_132, %c3_133] : memref<8x24xf32, #tpu.memory_space<vmem>>, vector<8x1xf32>
      tpu.vector_store %arg8[%c0_132, %c3_133], %118 {strides = array<i32>} : memref<8x24xf32, #tpu.memory_space<vmem>>, vector<8x1xf32>,
      %120 = vector.extract_strided_slice %117 {offsets = [0, 1], sizes = [8, 1], strides = [1, 1]} : vector<8x4xf32> to vector<8x1xf32>
      %c0_134 = arith.constant 0 : index
      %c2_135 = arith.constant 2 : index
      %121 = vector.load %arg8[%c0_134, %c2_135] : memref<8x24xf32, #tpu.memory_space<vmem>>, vector<8x1xf32>
      tpu.vector_store %arg8[%c0_134, %c2_135], %120 {strides = array<i32>} : memref<8x24xf32, #tpu.memory_space<vmem>>, vector<8x1xf32>,
      %122 = vector.extract_strided_slice %117 {offsets = [0, 2], sizes = [8, 1], strides = [1, 1]} : vector<8x4xf32> to vector<8x1xf32>
      %c0_136 = arith.constant 0 : index
      %c1_137 = arith.constant 1 : index
      %123 = vector.load %arg8[%c0_136, %c1_137] : memref<8x24xf32, #tpu.memory_space<vmem>>, vector<8x1xf32>
      tpu.vector_store %arg8[%c0_136, %c1_137], %122 {strides = array<i32>} : memref<8x24xf32, #tpu.memory_space<vmem>>, vector<8x1xf32>,
      %124 = vector.extract_strided_slice %117 {offsets = [0, 3], sizes = [8, 1], strides = [1, 1]} : vector<8x4xf32> to vector<8x1xf32>
      %c0_138 = arith.constant 0 : index
      %c0_139 = arith.constant 0 : index
      %125 = vector.load %arg8[%c0_138, %c0_139] : memref<8x24xf32, #tpu.memory_space<vmem>>, vector<8x1xf32>
      tpu.vector_store %arg8[%c0_138, %c0_139], %124 {strides = array<i32>} : memref<8x24xf32, #tpu.memory_space<vmem>>, vector<8x1xf32>,
    } else {
    }
    %c0_i32_68 = arith.constant 0 : i32
    %62 = arith.cmpi eq, %arg1, %c0_i32_68 : i32
    %63 = arith.extui %62 : i1 to i32
    %c0_i32_69 = arith.constant 0 : i32
    %64 = arith.cmpi ne, %63, %c0_i32_69 : i32
    scf.if %64 {
      %c0_130 = arith.constant 0 : index
      %c15 = arith.constant 15 : index
      %117 = vector.load %arg8[%c0_130, %c15] : memref<8x24xf32, #tpu.memory_space<vmem>>, vector<8x4xf32>
      %118 = vector.extract_strided_slice %117 {offsets = [0, 3], sizes = [8, 1], strides = [1, 1]} : vector<8x4xf32> to vector<8x1xf32>
      %c0_131 = arith.constant 0 : index
      %c20 = arith.constant 20 : index
      %119 = vector.load %arg8[%c0_131, %c20] : memref<8x24xf32, #tpu.memory_space<vmem>>, vector<8x1xf32>
      tpu.vector_store %arg8[%c0_131, %c20], %118 {strides = array<i32>} : memref<8x24xf32, #tpu.memory_space<vmem>>, vector<8x1xf32>,
      %120 = vector.extract_strided_slice %117 {offsets = [0, 2], sizes = [8, 1], strides = [1, 1]} : vector<8x4xf32> to vector<8x1xf32>
      %c0_132 = arith.constant 0 : index
      %c21 = arith.constant 21 : index
      %121 = vector.load %arg8[%c0_132, %c21] : memref<8x24xf32, #tpu.memory_space<vmem>>, vector<8x1xf32>
      tpu.vector_store %arg8[%c0_132, %c21], %120 {strides = array<i32>} : memref<8x24xf32, #tpu.memory_space<vmem>>, vector<8x1xf32>,
      %122 = vector.extract_strided_slice %117 {offsets = [0, 1], sizes = [8, 1], strides = [1, 1]} : vector<8x4xf32> to vector<8x1xf32>
      %c0_133 = arith.constant 0 : index
      %c22 = arith.constant 22 : index
      %123 = vector.load %arg8[%c0_133, %c22] : memref<8x24xf32, #tpu.memory_space<vmem>>, vector<8x1xf32>
      tpu.vector_store %arg8[%c0_133, %c22], %122 {strides = array<i32>} : memref<8x24xf32, #tpu.memory_space<vmem>>, vector<8x1xf32>,
      %124 = vector.extract_strided_slice %117 {offsets = [0, 0], sizes = [8, 1], strides = [1, 1]} : vector<8x4xf32> to vector<8x1xf32>
      %c0_134 = arith.constant 0 : index
      %c23 = arith.constant 23 : index
      %125 = vector.load %arg8[%c0_134, %c23] : memref<8x24xf32, #tpu.memory_space<vmem>>, vector<8x1xf32>
      tpu.vector_store %arg8[%c0_134, %c23], %124 {strides = array<i32>} : memref<8x24xf32, #tpu.memory_space<vmem>>, vector<8x1xf32>,
    } else {
    }
    %c0_70 = arith.constant 0 : index
    %c0_71 = arith.constant 0 : index
    %c0_72 = arith.constant 0 : index
    %65 = vector.load %arg5[%c0_70, %c0_71, %c0_72] : memref<9x8x8xf32, #tpu.memory_space<vmem>>, vector<1x8x8xf32>
    %66 = vector.shape_cast %65 : vector<1x8x8xf32> to vector<8x8xf32>
    %c0_73 = arith.constant 0 : index
    %c0_74 = arith.constant 0 : index
    %67 = vector.load %arg8[%c0_73, %c0_74] : memref<8x24xf32, #tpu.memory_space<vmem>>, vector<8x16xf32>
    %cst_75 = arith.constant dense<0.000000e+00> : vector<8x16xf32>
    %68 = tpu.matmul %66, %67, %cst_75 {dimension_numbers = #tpu.dot_dimension_numbers<[1], [0], [0], [1], [0, 0, 1, 1], [], []>} : vector<8x8xf32>, vector<8x16xf32>, vector<8x16xf32> -> vector<8x16xf32>
    %c1_76 = arith.constant 1 : index
    %c0_77 = arith.constant 0 : index
    %c0_78 = arith.constant 0 : index
    %69 = vector.load %arg5[%c1_76, %c0_77, %c0_78] : memref<9x8x8xf32, #tpu.memory_space<vmem>>, vector<1x8x8xf32>
    %70 = vector.shape_cast %69 : vector<1x8x8xf32> to vector<8x8xf32>
    %c0_79 = arith.constant 0 : index
    %c1_80 = arith.constant 1 : index
    %71 = vector.load %arg8[%c0_79, %c1_80] : memref<8x24xf32, #tpu.memory_space<vmem>>, vector<8x16xf32>
    %cst_81 = arith.constant dense<0.000000e+00> : vector<8x16xf32>
    %72 = tpu.matmul %70, %71, %cst_81 {dimension_numbers = #tpu.dot_dimension_numbers<[1], [0], [0], [1], [0, 0, 1, 1], [], []>} : vector<8x8xf32>, vector<8x16xf32>, vector<8x16xf32> -> vector<8x16xf32>
    %73 = arith.addf %68, %72 : vector<8x16xf32>
    %c2_82 = arith.constant 2 : index
    %c0_83 = arith.constant 0 : index
    %c0_84 = arith.constant 0 : index
    %74 = vector.load %arg5[%c2_82, %c0_83, %c0_84] : memref<9x8x8xf32, #tpu.memory_space<vmem>>, vector<1x8x8xf32>
    %75 = vector.shape_cast %74 : vector<1x8x8xf32> to vector<8x8xf32>
    %c0_85 = arith.constant 0 : index
    %c2_86 = arith.constant 2 : index
    %76 = vector.load %arg8[%c0_85, %c2_86] : memref<8x24xf32, #tpu.memory_space<vmem>>, vector<8x16xf32>
    %cst_87 = arith.constant dense<0.000000e+00> : vector<8x16xf32>
    %77 = tpu.matmul %75, %76, %cst_87 {dimension_numbers = #tpu.dot_dimension_numbers<[1], [0], [0], [1], [0, 0, 1, 1], [], []>} : vector<8x8xf32>, vector<8x16xf32>, vector<8x16xf32> -> vector<8x16xf32>
    %78 = arith.addf %73, %77 : vector<8x16xf32>
    %c3_88 = arith.constant 3 : index
    %c0_89 = arith.constant 0 : index
    %c0_90 = arith.constant 0 : index
    %79 = vector.load %arg5[%c3_88, %c0_89, %c0_90] : memref<9x8x8xf32, #tpu.memory_space<vmem>>, vector<1x8x8xf32>
    %80 = vector.shape_cast %79 : vector<1x8x8xf32> to vector<8x8xf32>
    %c0_91 = arith.constant 0 : index
    %c3_92 = arith.constant 3 : index
    %81 = vector.load %arg8[%c0_91, %c3_92] : memref<8x24xf32, #tpu.memory_space<vmem>>, vector<8x16xf32>
    %cst_93 = arith.constant dense<0.000000e+00> : vector<8x16xf32>
    %82 = tpu.matmul %80, %81, %cst_93 {dimension_numbers = #tpu.dot_dimension_numbers<[1], [0], [0], [1], [0, 0, 1, 1], [], []>} : vector<8x8xf32>, vector<8x16xf32>, vector<8x16xf32> -> vector<8x16xf32>
    %83 = arith.addf %78, %82 : vector<8x16xf32>
    %c4_94 = arith.constant 4 : index
    %c0_95 = arith.constant 0 : index
    %c0_96 = arith.constant 0 : index
    %84 = vector.load %arg5[%c4_94, %c0_95, %c0_96] : memref<9x8x8xf32, #tpu.memory_space<vmem>>, vector<1x8x8xf32>
    %85 = vector.shape_cast %84 : vector<1x8x8xf32> to vector<8x8xf32>
    %c0_97 = arith.constant 0 : index
    %c4_98 = arith.constant 4 : index
    %86 = vector.load %arg8[%c0_97, %c4_98] : memref<8x24xf32, #tpu.memory_space<vmem>>, vector<8x16xf32>
    %cst_99 = arith.constant dense<0.000000e+00> : vector<8x16xf32>
    %87 = tpu.matmul %85, %86, %cst_99 {dimension_numbers = #tpu.dot_dimension_numbers<[1], [0], [0], [1], [0, 0, 1, 1], [], []>} : vector<8x8xf32>, vector<8x16xf32>, vector<8x16xf32> -> vector<8x16xf32>
    %88 = arith.addf %83, %87 : vector<8x16xf32>
    %c5_100 = arith.constant 5 : index
    %c0_101 = arith.constant 0 : index
    %c0_102 = arith.constant 0 : index
    %89 = vector.load %arg5[%c5_100, %c0_101, %c0_102] : memref<9x8x8xf32, #tpu.memory_space<vmem>>, vector<1x8x8xf32>
    %90 = vector.shape_cast %89 : vector<1x8x8xf32> to vector<8x8xf32>
    %c0_103 = arith.constant 0 : index
    %c5_104 = arith.constant 5 : index
    %91 = vector.load %arg8[%c0_103, %c5_104] : memref<8x24xf32, #tpu.memory_space<vmem>>, vector<8x16xf32>
    %cst_105 = arith.constant dense<0.000000e+00> : vector<8x16xf32>
    %92 = tpu.matmul %90, %91, %cst_105 {dimension_numbers = #tpu.dot_dimension_numbers<[1], [0], [0], [1], [0, 0, 1, 1], [], []>} : vector<8x8xf32>, vector<8x16xf32>, vector<8x16xf32> -> vector<8x16xf32>
    %93 = arith.addf %88, %92 : vector<8x16xf32>
    %c6_106 = arith.constant 6 : index
    %c0_107 = arith.constant 0 : index
    %c0_108 = arith.constant 0 : index
    %94 = vector.load %arg5[%c6_106, %c0_107, %c0_108] : memref<9x8x8xf32, #tpu.memory_space<vmem>>, vector<1x8x8xf32>
    %95 = vector.shape_cast %94 : vector<1x8x8xf32> to vector<8x8xf32>
    %c0_109 = arith.constant 0 : index
    %c6_110 = arith.constant 6 : index
    %96 = vector.load %arg8[%c0_109, %c6_110] : memref<8x24xf32, #tpu.memory_space<vmem>>, vector<8x16xf32>
    %cst_111 = arith.constant dense<0.000000e+00> : vector<8x16xf32>
    %97 = tpu.matmul %95, %96, %cst_111 {dimension_numbers = #tpu.dot_dimension_numbers<[1], [0], [0], [1], [0, 0, 1, 1], [], []>} : vector<8x8xf32>, vector<8x16xf32>, vector<8x16xf32> -> vector<8x16xf32>
    %98 = arith.addf %93, %97 : vector<8x16xf32>
    %c7_112 = arith.constant 7 : index
    %c0_113 = arith.constant 0 : index
    %c0_114 = arith.constant 0 : index
    %99 = vector.load %arg5[%c7_112, %c0_113, %c0_114] : memref<9x8x8xf32, #tpu.memory_space<vmem>>, vector<1x8x8xf32>
    %100 = vector.shape_cast %99 : vector<1x8x8xf32> to vector<8x8xf32>
    %c0_115 = arith.constant 0 : index
    %c7_116 = arith.constant 7 : index
    %101 = vector.load %arg8[%c0_115, %c7_116] : memref<8x24xf32, #tpu.memory_space<vmem>>, vector<8x16xf32>
    %cst_117 = arith.constant dense<0.000000e+00> : vector<8x16xf32>
    %102 = tpu.matmul %100, %101, %cst_117 {dimension_numbers = #tpu.dot_dimension_numbers<[1], [0], [0], [1], [0, 0, 1, 1], [], []>} : vector<8x8xf32>, vector<8x16xf32>, vector<8x16xf32> -> vector<8x16xf32>
    %103 = arith.addf %98, %102 : vector<8x16xf32>
    %c8_118 = arith.constant 8 : index
    %c0_119 = arith.constant 0 : index
    %c0_120 = arith.constant 0 : index
    %104 = vector.load %arg5[%c8_118, %c0_119, %c0_120] : memref<9x8x8xf32, #tpu.memory_space<vmem>>, vector<1x8x8xf32>
    %105 = vector.shape_cast %104 : vector<1x8x8xf32> to vector<8x8xf32>
    %c0_121 = arith.constant 0 : index
    %c8_122 = arith.constant 8 : index
    %106 = vector.load %arg8[%c0_121, %c8_122] : memref<8x24xf32, #tpu.memory_space<vmem>>, vector<8x16xf32>
    %cst_123 = arith.constant dense<0.000000e+00> : vector<8x16xf32>
    %107 = tpu.matmul %105, %106, %cst_123 {dimension_numbers = #tpu.dot_dimension_numbers<[1], [0], [0], [1], [0, 0, 1, 1], [], []>} : vector<8x8xf32>, vector<8x16xf32>, vector<8x16xf32> -> vector<8x16xf32>
    %108 = arith.addf %103, %107 : vector<8x16xf32>
    %c0_124 = arith.constant 0 : index
    %c0_125 = arith.constant 0 : index
    %109 = vector.load %arg6[%c0_124, %c0_125] : memref<8x1xf32, #tpu.memory_space<vmem>>, vector<8x1xf32>
    %110 = vector.broadcast %109 : vector<8x1xf32> to vector<8x16xf32>
    %111 = arith.addf %108, %110 : vector<8x16xf32>
    %cst_126 = arith.constant 0.000000e+00 : f32
    %112 = vector.broadcast %cst_126 : f32 to vector<8x16xf32>
    %113 = arith.maximumf %111, %112 : vector<8x16xf32>
    %c0_127 = arith.constant 0 : index
    %c0_128 = arith.constant 0 : index
    %c0_129 = arith.constant 0 : index
    %114 = vector.load %arg7[%c0_127, %c0_128, %c0_129] : memref<1x8x16xf32, #tpu.memory_space<vmem>>, vector<1x8x16xf32>
    %115 = vector.shape_cast %114 : vector<1x8x16xf32> to vector<8x16xf32>
    %116 = vector.shape_cast %113 : vector<8x16xf32> to vector<1x8x16xf32>
    tpu.vector_store %arg7[%c0_127, %c0_128, %c0_129], %116 {strides = array<i32>} : memref<1x8x16xf32, #tpu.memory_space<vmem>>, vector<1x8x16xf32>,
    return
  }
  func.func @transform_0(%arg0: i32, %arg1: i32) -> (i32, i32, i32, i32) {
    %c0_i32 = arith.constant 0 : i32
    %c0_i32_0 = arith.constant 0 : i32
    %c0_i32_1 = arith.constant 0 : i32
    return %arg0, %arg1, %c0_i32, %c0_i32_0 : i32, i32, i32, i32
  }
  func.func @transform_1(%arg0: i32, %arg1: i32) -> (i32, i32, i32) {
    %c0_i32 = arith.constant 0 : i32
    %c0_i32_0 = arith.constant 0 : i32
    %c0_i32_1 = arith.constant 0 : i32
    %c0_i32_2 = arith.constant 0 : i32
    return %c0_i32, %c0_i32_0, %c0_i32_1 : i32, i32, i32
  }
  func.func @transform_2(%arg0: i32, %arg1: i32) -> (i32, i32) {
    %c0_i32 = arith.constant 0 : i32
    %c0_i32_0 = arith.constant 0 : i32
    %c0_i32_1 = arith.constant 0 : i32
    return %c0_i32, %c0_i32_0 : i32, i32
  }
  func.func @transform_3(%arg0: i32, %arg1: i32) -> (i32, i32, i32) {
    %c0_i32 = arith.constant 0 : i32
    %c0_i32_0 = arith.constant 0 : i32
    %c0_i32_1 = arith.constant 0 : i32
    %c0_i32_2 = arith.constant 0 : i32
    return %c0_i32, %c0_i32_0, %c0_i32_1 : i32, i32, i32
  }
  func.func @transform_4(%arg0: i32, %arg1: i32) -> (i32, i32) {
    %c0_i32 = arith.constant 0 : i32
    %c0_i32_0 = arith.constant 0 : i32
    %c0_i32_1 = arith.constant 0 : i32
    return %c0_i32, %c0_i32_0 : i32, i32
  }
  func.func @transform_5(%arg0: i32, %arg1: i32) -> (i32, i32, i32) {
    %c0_i32 = arith.constant 0 : i32
    %c0_i32_0 = arith.constant 0 : i32
    return %arg0, %c0_i32, %arg1 : i32, i32, i32
  }
}

</mosaic_0001>

<llo_original>
// kernel: unet_down.1
$region0: #{unet_down.1}
  #allocation0 [shape = 'u32[]', space=smem, size = 0x4, offset = 0x4, fixed_abs, tag = 'smem constant byte address 0x4 - core index']
  #allocation1 [shape = 'u32[144,128]{1,0:T(1,128)}', space=vmem, size = 0x12000, scoped, tag = 'internal scratch']
  #allocation2 [shape = 'f32[8,24]{1,0:T(8,128)}', space=vmem, size = 0x1000, scoped, tag = 'scratch operand']
  %s0 = inlined_call_operand.vmem [shape: f32[2,1,4,32], index: 0, kind: input, shape index: {}]
  %s1 = inlined_call_operand.vmem [shape: f32[9,8,4], index: 1, kind: input, shape index: {}]
  %s2 = inlined_call_operand.vmem [shape: f32[8,1], index: 2, kind: input, shape index: {}]
  %s3 = inlined_call_operand.vmem [shape: f32[9,8,8], index: 3, kind: input, shape index: {}]
  %s4 = inlined_call_operand.vmem [shape: f32[8,1], index: 4, kind: input, shape index: {}]
  %s5 = inlined_call_operand.hbm [shape: f32[2,8,16], index: 5, kind: output, shape index: {}]
  %s6 = sld [smem:[#allocation0]]
  $region57: #{unet_down.1} parent=0
    _
  %s8 = ssub.s32 1, %s6
  %s9 = scalar_select 0, %s8, %s6
  $region1: #{unet_down.1} parent=0
    #allocation3 [shape = 'u8[8192]{0}', space=vmem, size = 0x2000, scoped, tag = 'output window, operand 0']
    #allocation4 [shape = 's32[2]{0}', space=sflag, size = 0x8, scoped, tag = 'scoped memory for unet_down.1']
    %10 = vsyncpa [#allocation4], 0
    %s11 = scalar_lea.sflag [#allocation4], 1
    %12 = vsyncpa %s11, 0
    loop: start=0, step=1, limit=4
    $region2: #{unet_down.1} parent=1 // loop_pre_header
      _
    $region3: #{unet_down.1} parent=1 // loop_header
      %s14 = sphi 0, %s18
      %p15 = scmp.ge.s32.totalorder %s14, 4
      %s21 = sphi 0, %s33
      %s22 = sphi 0, %s29
      %s23 = sphi 0, %s21
      %s24 = sphi 0, %s22
      %s25 = sphi 0, %s23
      %s26 = sphi 0, %s24
      %s38 = sphi 0, %s40
      %s41 = sphi 0, %s38
      %s42 = sphi 0, %s41
      %s58 = sphi 0, %s42
      %s62 = sphi 0, %s62
      %s64 = sphi 0, %s62
      %s65 = sphi 0, %s64
      %s79 = sphi 0, %s65
      %s83 = sphi 0, %s83
      %s85 = sphi 0, %s83
      %s86 = sphi 0, %s85
      %s100 = sphi 0, %s86
      %s104 = sphi 0, %s104
      %s106 = sphi 0, %s104
      %s107 = sphi 0, %s106
      %s121 = sphi 0, %s107
      %s125 = sphi 0, %s125
      %s127 = sphi 0, %s125
      %s128 = sphi 0, %s127
      %s142 = sphi 0, %s128
      %s150 = sphi 0, %s152
      %s153 = sphi 0, %s150
      %s154 = sphi 0, %s153
      %s170 = sphi 0, %s154
    $region4: #{unet_down.1} parent=1 // loop_header_branch
      %17 = sbr.rel (%p15) target = $region8
    $region5: #{unet_down.1} parent=1 // loop_body
      %s19 = ssub.s32 %s14, 1
      %s20 = ssub.s32 %s14, 2
      %s27 = sadd.s32 1, %s22
      %p28 = scmp.ge.s32.totalorder %s27, 1
      %s29 = scalar_select %p28, 0, %s27
      %s30 = sadd.s32 1, %s21
      %s31 = scalar_select %p28, %s30, %s21
      %p32 = scmp.ge.s32.totalorder %s31, 2
      %s33 = scalar_select %p32, 0, %s31
      %s34 = ssub.s32 %s21, %s33
      %s35 = ssub.s32 %s22, %s29
      %s36 = sor.u32 %s34, %s35
      %p37 = scmp.eq.s32.totalorder %s36, 0
      %s39 = sadd.s32 %s38, 1
      %s40 = scalar_select %p37, %s38, %s39
      %p43 = pneg %p37
      %p44 = scmp.eq.s32.totalorder %s14, 1
      %p45 = por %p43, %p44
      %p46 = scmp.ne.s32.totalorder %s38, %s41
      %p47 = scmp.eq.s32.totalorder %s14, 0
      %p48 = por %p46, %p47
      %p49 = scmp.ne.s32.totalorder %s38, %s41
      %p50 = scmp.eq.s32.totalorder %s19, 1
      %p51 = por %p49, %p50
      %p52 = scmp.ne.s32.totalorder %s41, %s42
      %p53 = scmp.eq.s32.totalorder %s19, 0
      %p54 = por %p52, %p53
      %p55 = scmp.ne.s32.totalorder %s41, %s42
      %p56 = scmp.eq.s32.totalorder %s20, 1
      %p57 = por %p55, %p56
      %p59 = scmp.ne.s32.totalorder %s42, %s58
      %p60 = scmp.eq.s32.totalorder %s20, 0
      %p61 = por %p59, %p60
      %s63 = sadd.s32 %s62, 1
      %p66 = scmp.eq.s32.totalorder %s14, 1
      %p67 = scmp.ne.s32.totalorder %s62, %s64
      %p68 = scmp.eq.s32.totalorder %s14, 0
      %p69 = por %p67, %p68
      %p70 = scmp.ne.s32.totalorder %s62, %s64
      %p71 = scmp.eq.s32.totalorder %s19, 1
      %p72 = por %p70, %p71
      %p73 = scmp.ne.s32.totalorder %s64, %s65
      %p74 = scmp.eq.s32.totalorder %s19, 0
      %p75 = por %p73, %p74
      %p76 = scmp.ne.s32.totalorder %s64, %s65
      %p77 = scmp.eq.s32.totalorder %s20, 1
      %p78 = por %p76, %p77
      %p80 = scmp.ne.s32.totalorder %s65, %s79
      %p81 = scmp.eq.s32.totalorder %s20, 0
      %p82 = por %p80, %p81
      %s84 = sadd.s32 %s83, 1
      %p87 = scmp.eq.s32.totalorder %s14, 1
      %p88 = scmp.ne.s32.totalorder %s83, %s85
      %p89 = scmp.eq.s32.totalorder %s14, 0
      %p90 = por %p88, %p89
      %p91 = scmp.ne.s32.totalorder %s83, %s85
      %p92 = scmp.eq.s32.totalorder %s19, 1
      %p93 = por %p91, %p92
      %p94 = scmp.ne.s32.totalorder %s85, %s86
      %p95 = scmp.eq.s32.totalorder %s19, 0
      %p96 = por %p94, %p95
      %p97 = scmp.ne.s32.totalorder %s85, %s86
      %p98 = scmp.eq.s32.totalorder %s20, 1
      %p99 = por %p97, %p98
      %p101 = scmp.ne.s32.totalorder %s86, %s100
      %p102 = scmp.eq.s32.totalorder %s20, 0
      %p103 = por %p101, %p102
      %s105 = sadd.s32 %s104, 1
      %p108 = scmp.eq.s32.totalorder %s14, 1
      %p109 = scmp.ne.s32.totalorder %s104, %s106
      %p110 = scmp.eq.s32.totalorder %s14, 0
      %p111 = por %p109, %p110
      %p112 = scmp.ne.s32.totalorder %s104, %s106
      %p113 = scmp.eq.s32.totalorder %s19, 1
      %p114 = por %p112, %p113
      %p115 = scmp.ne.s32.totalorder %s106, %s107
      %p116 = scmp.eq.s32.totalorder %s19, 0
      %p117 = por %p115, %p116
      %p118 = scmp.ne.s32.totalorder %s106, %s107
      %p119 = scmp.eq.s32.totalorder %s20, 1
      %p120 = por %p118, %p119
      %p122 = scmp.ne.s32.totalorder %s107, %s121
      %p123 = scmp.eq.s32.totalorder %s20, 0
      %p124 = por %p122, %p123
      %s126 = sadd.s32 %s125, 1
      %p129 = scmp.eq.s32.totalorder %s14, 1
      %p130 = scmp.ne.s32.totalorder %s125, %s127
      %p131 = scmp.eq.s32.totalorder %s14, 0
      %p132 = por %p130, %p131
      %p133 = scmp.ne.s32.totalorder %s125, %s127
      %p134 = scmp.eq.s32.totalorder %s19, 1
      %p135 = por %p133, %p134
      %p136 = scmp.ne.s32.totalorder %s127, %s128
      %p137 = scmp.eq.s32.totalorder %s19, 0
      %p138 = por %p136, %p137
      %p139 = scmp.ne.s32.totalorder %s127, %s128
      %p140 = scmp.eq.s32.totalorder %s20, 1
      %p141 = por %p139, %p140
      %p143 = scmp.ne.s32.totalorder %s128, %s142
      %p144 = scmp.eq.s32.totalorder %s20, 0
      %p145 = por %p143, %p144
      %s146 = ssub.s32 %s21, %s33
      %s147 = ssub.s32 %s22, %s29
      %s148 = sor.u32 %s146, %s147
      %p149 = scmp.eq.s32.totalorder %s148, 0
      %s151 = sadd.s32 %s150, 1
      %s152 = scalar_select %p149, %s150, %s151
      %p155 = pneg %p149
      %p156 = scmp.eq.s32.totalorder %s14, 1
      %p157 = por %p155, %p156
      %p158 = scmp.ne.s32.totalorder %s150, %s153
      %p159 = scmp.eq.s32.totalorder %s14, 0
      %p160 = por %p158, %p159
      %p161 = scmp.ne.s32.totalorder %s150, %s153
      %p162 = scmp.eq.s32.totalorder %s19, 1
      %p163 = por %p161, %p162
      %p164 = scmp.ne.s32.totalorder %s153, %s154
      %p165 = scmp.eq.s32.totalorder %s19, 0
      %p166 = por %p164, %p165
      %p167 = scmp.ne.s32.totalorder %s153, %s154
      %p168 = scmp.eq.s32.totalorder %s20, 1
      %p169 = por %p167, %p168
      %p171 = scmp.ne.s32.totalorder %s154, %s170
      %p172 = scmp.eq.s32.totalorder %s20, 0
      %p173 = por %p171, %p172
      %p174 = scmp.le.s32.totalorder 1, %s14
      %p175 = scmp.lt.s32.totalorder %s14, 3
      %p176 = pnand %p174, %p175
      %p177 = pneg %p176
      // Predicated region
      $region9: #{unet_down.1} parent=5 // pred_check
        _
      $region10: #{unet_down.1} parent=5 // pred_check_branch
        %179 = sbr.rel (%p176) target = $region12
      $region11: #{unet_down.1} parent=5 // pred_region
        %s180 = ssub.s32 %s14, 1
        // Predicated region
        $region13: #{unet_down.1} parent=11 // pred_check
          %p181 = pneg %p75
        $region14: #{unet_down.1} parent=11 // pred_check_branch
          %183 = sbr.rel (%p181) target = $region16
        $region15: #{unet_down.1} parent=11 // pred_region
          _
        $region16: #{unet_down.1} parent=11 // pred_fallthru
          _
        // Predicated region
        $region17: #{unet_down.1} parent=11 // pred_check
          %p184 = pneg %p96
        $region18: #{unet_down.1} parent=11 // pred_check_branch
          %186 = sbr.rel (%p184) target = $region20
        $region19: #{unet_down.1} parent=11 // pred_region
          _
        $region20: #{unet_down.1} parent=11 // pred_fallthru
          _
        // Predicated region
        $region21: #{unet_down.1} parent=11 // pred_check
          %p187 = pneg %p117
        $region22: #{unet_down.1} parent=11 // pred_check_branch
          %189 = sbr.rel (%p187) target = $region24
        $region23: #{unet_down.1} parent=11 // pred_region
          _
        $region24: #{unet_down.1} parent=11 // pred_fallthru
          _
        // Predicated region
        $region25: #{unet_down.1} parent=11 // pred_check
          %p190 = pneg %p138
        $region26: #{unet_down.1} parent=11 // pred_check_branch
          %192 = sbr.rel (%p190) target = $region28
        $region27: #{unet_down.1} parent=11 // pred_region
          _
        $region28: #{unet_down.1} parent=11 // pred_fallthru
          _
      $region12: #{unet_down.1} parent=5 // pred_fallthru
        _
      %p193 = scmp.lt.s32.totalorder %s14, 2
      // Predicated region
      $region29: #{unet_down.1} parent=5 // pred_check
        %p194 = pneg %p193
      $region30: #{unet_down.1} parent=5 // pred_check_branch
        %196 = sbr.rel (%p194) target = $region32
      $region31: #{unet_down.1} parent=5 // pred_region
        // Predicated region
        $region33: #{unet_down.1} parent=31 // pred_check
          %p197 = pneg %p48
        $region34: #{unet_down.1} parent=31 // pred_check_branch
          %199 = sbr.rel (%p197) target = $region36
        $region35: #{unet_down.1} parent=31 // pred_region
          %p200 = scmp.lt.s32.totalorder %s21, 1
          %s201 = scalar_select %p200, %s21, 1
          %p202 = scmp.lt.s32.totalorder %s22, 0
          %s203 = scalar_select %p202, %s22, 0
          %s204 = sadd.s32 %s203, %s201
          %s205 = smul.addr %s204, 4
          %s206 = scalar_lea.vmem %s0, %s205
        $region36: #{unet_down.1} parent=31 // pred_fallthru
          _
      $region32: #{unet_down.1} parent=5 // pred_fallthru
        _
      %p207 = scmp.le.s32.totalorder 1, %s14
      %p208 = scmp.lt.s32.totalorder %s14, 3
      %p209 = pnand %p207, %p208
      %p210 = pneg %p209
      // Predicated region
      $region37: #{unet_down.1} parent=5 // pred_check
        _
      $region38: #{unet_down.1} parent=5 // pred_check_branch
        %212 = sbr.rel (%p209) target = $region40
      $region39: #{unet_down.1} parent=5 // pred_region
        %s213 = ssub.s32 %s14, 1
        %p214 = scmp.lt.s32.totalorder %s23, 1
        %s215 = scalar_select %p214, %s23, 1
        %p216 = scmp.lt.s32.totalorder %s24, 0
        %s217 = scalar_select %p216, %s24, 0
        %s218 = sadd.s32 %s217, %s215
        %s219 = smul.addr %s218, 4
        %s220 = scalar_lea.vmem %s0, %s219
        %p221 = pneg %p54
        %p222 = pneg %p51
        %p223 = pneg %p75
        %p224 = pneg %p72
        %p225 = pneg %p96
        %p226 = pneg %p93
        %p227 = pneg %p117
        %p228 = pneg %p114
        %p229 = pneg %p138
        %p230 = pneg %p135
        %p231 = pneg %p166
        %p232 = pneg %p163
        %s233 = sand.u32 %s153, 1
        %s234 = scalar_lea.sflag [#allocation4], %s233
        %s235 = sand.u32 %s153, 1
        %s236 = smul.addr %s235, 8
        %s237 = scalar_lea.vmem [#allocation3], %s236
        %p238 = scmp.lt.s32.totalorder %s23, 1
        %s239 = scalar_select %p238, %s23, 1
        %p240 = scmp.lt.s32.totalorder %s24, 0
        %s241 = scalar_select %p240, %s24, 0
        %s242 = sadd.s32 %s241, %s239
        %s243 = smul.addr %s242, 4
        %s244 = scalar_lea.vmem %s0, %s243
        %v245 = vld [vmem:[%s1] sm:$0xff]
        %v246 = vld [vmem:[%s244] sm:$0xf]
        %s247 = scalar_lea.vmem %s1, 8
        %v248 = vld [vmem:[%s247] sm:$0xff]
        %250 = vrot.lane.b32.xlu0 %v246, 127
        %v251 = vpop.permute.xlu0 %250
        %vm252 = vcmask 31744
        %v254 = vsel %vm252, %v248, 0
        %vm256 = vcmask 1043456
        %v257 = vsel %vm256, %v251, 0
        %259 = vmatprep.subr.mxu0 0.0
        %260 = vmatpush1.msra.mxu0 %v257
        %261 = vmatprep.subr.mxu0 0.0
        %262 = vmatpush1.msra.mxu0 0.0
        %263 = vmatprep.subr.mxu0 0.0
        %264 = vmatpush1.msra.mxu0 0.0
        %265 = vmatprep.subr.mxu0 0.0
        %266 = vmatpush1.msra.mxu0 0.0
        %267 = vmatprep.subr.mxu0 0.0
        %268 = vmatpush1.msra.mxu0 0.0
        %269 = vmatprep.subr.mxu0 0.0
        %270 = vmatpush1.msra.mxu0 0.0
        %271 = vmatprep.subr.mxu0 0.0
        %272 = vmatpush1.msra.mxu0 0.0
        %273 = vmatprep.subr.mxu0 0.0
        %274 = vmatpush1.msra.mxu0 0.0
        %275 = vmatprep.subr.mxu0 0.0
        %276 = vmatpush1.msra.mxu0 0.0
        %277 = vmatprep.subr.mxu0 0.0
        %278 = vmatpush1.msra.mxu0 0.0
        %279 = vmatprep.subr.mxu0 0.0
        %280 = vmatpush1.msra.mxu0 0.0
        %281 = vmatprep.subr.mxu0 0.0
        %282 = vmatpush1.msra.mxu0 0.0
        %283 = vmatprep.subr.mxu0 0.0
        %284 = vmatpush1.msra.mxu0 0.0
        %285 = vmatprep.subr.mxu0 0.0
        %286 = vmatpush1.msra.mxu0 0.0
        %287 = vmatprep.subr.mxu0 0.0
        %288 = vmatpush1.msra.mxu0 0.0
        %289 = vmatprep.subr.mxu0 0.0
        %290 = vmatpush1.msra.mxu0 0.0
        %291 = vmatprep.subr.mxu0 0.0
        %292 = vmatpush1.msra.mxu0 0.0
        %293 = vmatprep.subr.mxu0 0.0
        %294 = vmatpush1.msra.mxu0 0.0
        %295 = vmatprep.subr.mxu0 0.0
        %296 = vmatpush1.msra.mxu0 0.0
        %297 = vmatprep.subr.mxu0 0.0
        %298 = vmatpush1.msra.mxu0 0.0
        %299 = vmatprep.subr.mxu0 0.0
        %300 = vmatpush1.msra.mxu0 0.0
        %301 = vmatprep.subr.mxu0 0.0
        %302 = vmatpush1.msra.mxu0 0.0
        %303 = vmatprep.subr.mxu0 0.0
        %304 = vmatpush1.msra.mxu0 0.0
        %305 = vmatprep.subr.mxu0 0.0
        %306 = vmatpush1.msra.mxu0 0.0
        %307 = vmatprep.subr.mxu0 0.0
        %308 = vmatpush1.msra.mxu0 0.0
        %309 = vmatprep.subr.mxu0 0.0
        %310 = vmatpush1.msra.mxu0 0.0
        %311 = vmatprep.subr.mxu0 0.0
        %312 = vmatpush1.msra.mxu0 0.0
        %313 = vmatprep.subr.mxu0 0.0
        %314 = vmatpush1.msra.mxu0 0.0
        %315 = vmatprep.subr.mxu0 0.0
        %316 = vmatpush1.msra.mxu0 0.0
        %317 = vmatprep.subr.mxu0 0.0
        %318 = vmatpush1.msra.mxu0 0.0
        %319 = vmatprep.subr.mxu0 0.0
        %320 = vmatpush1.msra.mxu0 0.0
        %321 = vmatprep.subr.mxu0 0.0
        %322 = vmatpush1.msra.mxu0 0.0
        %323 = vmatprep.mubr.f32.mxu0 0.0
        %324 = vmatmul.mubr.f32.gmra.mrb[0].mxu0 %v254
        %v325 = vpop.f32.mrb[0].mxu0
        %v326 = vadd.f32 0.0, %v325
        %v327 = vpop.f32.mrb[0].mxu0
        %328 = vdwg.mxu0
        %v330 = vsel %vm252, %v245, 0
        %v332 = vsel %vm256, %v246, 0
        %334 = vmatprep.subr.mxu0 0.0
        %335 = vmatpush1.msra.mxu0 %v332
        %336 = vmatprep.subr.mxu0 0.0
        %337 = vmatpush1.msra.mxu0 0.0
        %338 = vmatprep.subr.mxu0 0.0
        %339 = vmatpush1.msra.mxu0 0.0
        %340 = vmatprep.subr.mxu0 0.0
        %341 = vmatpush1.msra.mxu0 0.0
        %342 = vmatprep.subr.mxu0 0.0
        %343 = vmatpush1.msra.mxu0 0.0
        %344 = vmatprep.subr.mxu0 0.0
        %345 = vmatpush1.msra.mxu0 0.0
        %346 = vmatprep.subr.mxu0 0.0
        %347 = vmatpush1.msra.mxu0 0.0
        %348 = vmatprep.subr.mxu0 0.0
        %349 = vmatpush1.msra.mxu0 0.0
        %350 = vmatprep.subr.mxu0 0.0
        %351 = vmatpush1.msra.mxu0 0.0
        %352 = vmatprep.subr.mxu0 0.0
        %353 = vmatpush1.msra.mxu0 0.0
        %354 = vmatprep.subr.mxu0 0.0
        %355 = vmatpush1.msra.mxu0 0.0
        %356 = vmatprep.subr.mxu0 0.0
        %357 = vmatpush1.msra.mxu0 0.0
        %358 = vmatprep.subr.mxu0 0.0
        %359 = vmatpush1.msra.mxu0 0.0
        %360 = vmatprep.subr.mxu0 0.0
        %361 = vmatpush1.msra.mxu0 0.0
        %362 = vmatprep.subr.mxu0 0.0
        %363 = vmatpush1.msra.mxu0 0.0
        %364 = vmatprep.subr.mxu0 0.0
        %365 = vmatpush1.msra.mxu0 0.0
        %366 = vmatprep.subr.mxu0 0.0
        %367 = vmatpush1.msra.mxu0 0.0
        %368 = vmatprep.subr.mxu0 0.0
        %369 = vmatpush1.msra.mxu0 0.0
        %370 = vmatprep.subr.mxu0 0.0
        %371 = vmatpush1.msra.mxu0 0.0
        %372 = vmatprep.subr.mxu0 0.0
        %373 = vmatpush1.msra.mxu0 0.0
        %374 = vmatprep.subr.mxu0 0.0
        %375 = vmatpush1.msra.mxu0 0.0
        %376 = vmatprep.subr.mxu0 0.0
        %377 = vmatpush1.msra.mxu0 0.0
        %378 = vmatprep.subr.mxu0 0.0
        %379 = vmatpush1.msra.mxu0 0.0
        %380 = vmatprep.subr.mxu0 0.0
        %381 = vmatpush1.msra.mxu0 0.0
        %382 = vmatprep.subr.mxu0 0.0
        %383 = vmatpush1.msra.mxu0 0.0
        %384 = vmatprep.subr.mxu0 0.0
        %385 = vmatpush1.msra.mxu0 0.0
        %386 = vmatprep.subr.mxu0 0.0
        %387 = vmatpush1.msra.mxu0 0.0
        %388 = vmatprep.subr.mxu0 0.0
        %389 = vmatpush1.msra.mxu0 0.0
        %390 = vmatprep.subr.mxu0 0.0
        %391 = vmatpush1.msra.mxu0 0.0
        %392 = vmatprep.subr.mxu0 0.0
        %393 = vmatpush1.msra.mxu0 0.0
        %394 = vmatprep.subr.mxu0 0.0
        %395 = vmatpush1.msra.mxu0 0.0
        %396 = vmatprep.subr.mxu0 0.0
        %397 = vmatpush1.msra.mxu0 0.0
        %398 = vmatprep.mubr.f32.mxu0 0.0
        %399 = vmatmul.mubr.f32.gmra.mrb[0].mxu0 %v330
        %v400 = vpop.f32.mrb[0].mxu0
        %v401 = vadd.f32 %v326, %v400
        %v402 = vpop.f32.mrb[0].mxu0
        %403 = vdwg.mxu0
        %s404 = scalar_lea.vmem %s1, 16
        %v405 = vld [vmem:[%s404] sm:$0xff]
        %406 = vrot.lane.b32.xlu0 %v246, 126
        %v407 = vpop.permute.xlu0 %406
        %v409 = vsel %vm252, %v405, 0
        %v411 = vsel %vm256, %v407, 0
        %413 = vmatprep.subr.mxu0 0.0
        %414 = vmatpush1.msra.mxu0 %v411
        %415 = vmatprep.subr.mxu0 0.0
        %416 = vmatpush1.msra.mxu0 0.0
        %417 = vmatprep.subr.mxu0 0.0
        %418 = vmatpush1.msra.mxu0 0.0
        %419 = vmatprep.subr.mxu0 0.0
        %420 = vmatpush1.msra.mxu0 0.0
        %421 = vmatprep.subr.mxu0 0.0
        %422 = vmatpush1.msra.mxu0 0.0
        %423 = vmatprep.subr.mxu0 0.0
        %424 = vmatpush1.msra.mxu0 0.0
        %425 = vmatprep.subr.mxu0 0.0
        %426 = vmatpush1.msra.mxu0 0.0
        %427 = vmatprep.subr.mxu0 0.0
        %428 = vmatpush1.msra.mxu0 0.0
        %429 = vmatprep.subr.mxu0 0.0
        %430 = vmatpush1.msra.mxu0 0.0
        %431 = vmatprep.subr.mxu0 0.0
        %432 = vmatpush1.msra.mxu0 0.0
        %433 = vmatprep.subr.mxu0 0.0
        %434 = vmatpush1.msra.mxu0 0.0
        %435 = vmatprep.subr.mxu0 0.0
        %436 = vmatpush1.msra.mxu0 0.0
        %437 = vmatprep.subr.mxu0 0.0
        %438 = vmatpush1.msra.mxu0 0.0
        %439 = vmatprep.subr.mxu0 0.0
        %440 = vmatpush1.msra.mxu0 0.0
        %441 = vmatprep.subr.mxu0 0.0
        %442 = vmatpush1.msra.mxu0 0.0
        %443 = vmatprep.subr.mxu0 0.0
        %444 = vmatpush1.msra.mxu0 0.0
        %445 = vmatprep.subr.mxu0 0.0
        %446 = vmatpush1.msra.mxu0 0.0
        %447 = vmatprep.subr.mxu0 0.0
        %448 = vmatpush1.msra.mxu0 0.0
        %449 = vmatprep.subr.mxu0 0.0
        %450 = vmatpush1.msra.mxu0 0.0
        %451 = vmatprep.subr.mxu0 0.0
        %452 = vmatpush1.msra.mxu0 0.0
        %453 = vmatprep.subr.mxu0 0.0
        %454 = vmatpush1.msra.mxu0 0.0
        %455 = vmatprep.subr.mxu0 0.0
        %456 = vmatpush1.msra.mxu0 0.0
        %457 = vmatprep.subr.mxu0 0.0
        %458 = vmatpush1.msra.mxu0 0.0
        %459 = vmatprep.subr.mxu0 0.0
        %460 = vmatpush1.msra.mxu0 0.0
        %461 = vmatprep.subr.mxu0 0.0
        %462 = vmatpush1.msra.mxu0 0.0
        %463 = vmatprep.subr.mxu0 0.0
        %464 = vmatpush1.msra.mxu0 0.0
        %465 = vmatprep.subr.mxu0 0.0
        %466 = vmatpush1.msra.mxu0 0.0
        %467 = vmatprep.subr.mxu0 0.0
        %468 = vmatpush1.msra.mxu0 0.0
        %469 = vmatprep.subr.mxu0 0.0
        %470 = vmatpush1.msra.mxu0 0.0
        %471 = vmatprep.subr.mxu0 0.0
        %472 = vmatpush1.msra.mxu0 0.0
        %473 = vmatprep.subr.mxu0 0.0
        %474 = vmatpush1.msra.mxu0 0.0
        %475 = vmatprep.subr.mxu0 0.0
        %476 = vmatpush1.msra.mxu0 0.0
        %477 = vmatprep.mubr.f32.mxu0 0.0
        %478 = vmatmul.mubr.f32.gmra.mrb[0].mxu0 %v409
        %v479 = vpop.f32.mrb[0].mxu0
        %v480 = vadd.f32 0.0, %v479
        %v481 = vpop.f32.mrb[0].mxu0
        %482 = vdwg.mxu0
        %v483 = vadd.f32 %v401, %v480
        %s484 = scalar_lea.vmem %s1, 24
        %v485 = vld [vmem:[%s484] sm:$0xff]
        %486 = vrot.lane.b32.xlu0 %v246, 125
        %v487 = vpop.permute.xlu0 %486
        %v489 = vsel %vm252, %v485, 0
        %v491 = vsel %vm256, %v487, 0
        %493 = vmatprep.subr.mxu0 0.0
        %494 = vmatpush1.msra.mxu0 %v491
        %495 = vmatprep.subr.mxu0 0.0
        %496 = vmatpush1.msra.mxu0 0.0
        %497 = vmatprep.subr.mxu0 0.0
        %498 = vmatpush1.msra.mxu0 0.0
        %499 = vmatprep.subr.mxu0 0.0
        %500 = vmatpush1.msra.mxu0 0.0
        %501 = vmatprep.subr.mxu0 0.0
        %502 = vmatpush1.msra.mxu0 0.0
        %503 = vmatprep.subr.mxu0 0.0
        %504 = vmatpush1.msra.mxu0 0.0
        %505 = vmatprep.subr.mxu0 0.0
        %506 = vmatpush1.msra.mxu0 0.0
        %507 = vmatprep.subr.mxu0 0.0
        %508 = vmatpush1.msra.mxu0 0.0
        %509 = vmatprep.subr.mxu0 0.0
        %510 = vmatpush1.msra.mxu0 0.0
        %511 = vmatprep.subr.mxu0 0.0
        %512 = vmatpush1.msra.mxu0 0.0
        %513 = vmatprep.subr.mxu0 0.0
        %514 = vmatpush1.msra.mxu0 0.0
        %515 = vmatprep.subr.mxu0 0.0
        %516 = vmatpush1.msra.mxu0 0.0
        %517 = vmatprep.subr.mxu0 0.0
        %518 = vmatpush1.msra.mxu0 0.0
        %519 = vmatprep.subr.mxu0 0.0
        %520 = vmatpush1.msra.mxu0 0.0
        %521 = vmatprep.subr.mxu0 0.0
        %522 = vmatpush1.msra.mxu0 0.0
        %523 = vmatprep.subr.mxu0 0.0
        %524 = vmatpush1.msra.mxu0 0.0
        %525 = vmatprep.subr.mxu0 0.0
        %526 = vmatpush1.msra.mxu0 0.0
        %527 = vmatprep.subr.mxu0 0.0
        %528 = vmatpush1.msra.mxu0 0.0
        %529 = vmatprep.subr.mxu0 0.0
        %530 = vmatpush1.msra.mxu0 0.0
        %531 = vmatprep.subr.mxu0 0.0
        %532 = vmatpush1.msra.mxu0 0.0
        %533 = vmatprep.subr.mxu0 0.0
        %534 = vmatpush1.msra.mxu0 0.0
        %535 = vmatprep.subr.mxu0 0.0
        %536 = vmatpush1.msra.mxu0 0.0
        %537 = vmatprep.subr.mxu0 0.0
        %538 = vmatpush1.msra.mxu0 0.0
        %539 = vmatprep.subr.mxu0 0.0
        %540 = vmatpush1.msra.mxu0 0.0
        %541 = vmatprep.subr.mxu0 0.0
        %542 = vmatpush1.msra.mxu0 0.0
        %543 = vmatprep.subr.mxu0 0.0
        %544 = vmatpush1.msra.mxu0 0.0
        %545 = vmatprep.subr.mxu0 0.0
        %546 = vmatpush1.msra.mxu0 0.0
        %547 = vmatprep.subr.mxu0 0.0
        %548 = vmatpush1.msra.mxu0 0.0
        %549 = vmatprep.subr.mxu0 0.0
        %550 = vmatpush1.msra.mxu0 0.0
        %551 = vmatprep.subr.mxu0 0.0
        %552 = vmatpush1.msra.mxu0 0.0
        %553 = vmatprep.subr.mxu0 0.0
        %554 = vmatpush1.msra.mxu0 0.0
        %555 = vmatprep.subr.mxu0 0.0
        %556 = vmatpush1.msra.mxu0 0.0
        %557 = vmatprep.mubr.f32.mxu0 0.0
        %558 = vmatmul.mubr.f32.gmra.mrb[0].mxu0 %v489
        %v559 = vpop.f32.mrb[0].mxu0
        %v560 = vadd.f32 0.0, %v559
        %v561 = vpop.f32.mrb[0].mxu0
        %562 = vdwg.mxu0
        %v563 = vadd.f32 %v483, %v560
        %s564 = scalar_lea.vmem %s1, 32
        %v565 = vld [vmem:[%s564] sm:$0xff]
        %566 = vrot.lane.b32.xlu0 %v246, 124
        %v567 = vpop.permute.xlu0 %566
        %v569 = vsel %vm252, %v565, 0
        %v571 = vsel %vm256, %v567, 0
        %573 = vmatprep.subr.mxu0 0.0
        %574 = vmatpush1.msra.mxu0 %v571
        %575 = vmatprep.subr.mxu0 0.0
        %576 = vmatpush1.msra.mxu0 0.0
        %577 = vmatprep.subr.mxu0 0.0
        %578 = vmatpush1.msra.mxu0 0.0
        %579 = vmatprep.subr.mxu0 0.0
        %580 = vmatpush1.msra.mxu0 0.0
        %581 = vmatprep.subr.mxu0 0.0
        %582 = vmatpush1.msra.mxu0 0.0
        %583 = vmatprep.subr.mxu0 0.0
        %584 = vmatpush1.msra.mxu0 0.0
        %585 = vmatprep.subr.mxu0 0.0
        %586 = vmatpush1.msra.mxu0 0.0
        %587 = vmatprep.subr.mxu0 0.0
        %588 = vmatpush1.msra.mxu0 0.0
        %589 = vmatprep.subr.mxu0 0.0
        %590 = vmatpush1.msra.mxu0 0.0
        %591 = vmatprep.subr.mxu0 0.0
        %592 = vmatpush1.msra.mxu0 0.0
        %593 = vmatprep.subr.mxu0 0.0
        %594 = vmatpush1.msra.mxu0 0.0
        %595 = vmatprep.subr.mxu0 0.0
        %596 = vmatpush1.msra.mxu0 0.0
        %597 = vmatprep.subr.mxu0 0.0
        %598 = vmatpush1.msra.mxu0 0.0
        %599 = vmatprep.subr.mxu0 0.0
        %600 = vmatpush1.msra.mxu0 0.0
        %601 = vmatprep.subr.mxu0 0.0
        %602 = vmatpush1.msra.mxu0 0.0
        %603 = vmatprep.subr.mxu0 0.0
        %604 = vmatpush1.msra.mxu0 0.0
        %605 = vmatprep.subr.mxu0 0.0
        %606 = vmatpush1.msra.mxu0 0.0
        %607 = vmatprep.subr.mxu0 0.0
        %608 = vmatpush1.msra.mxu0 0.0
        %609 = vmatprep.subr.mxu0 0.0
        %610 = vmatpush1.msra.mxu0 0.0
        %611 = vmatprep.subr.mxu0 0.0
        %612 = vmatpush1.msra.mxu0 0.0
        %613 = vmatprep.subr.mxu0 0.0
        %614 = vmatpush1.msra.mxu0 0.0
        %615 = vmatprep.subr.mxu0 0.0
        %616 = vmatpush1.msra.mxu0 0.0
        %617 = vmatprep.subr.mxu0 0.0
        %618 = vmatpush1.msra.mxu0 0.0
        %619 = vmatprep.subr.mxu0 0.0
        %620 = vmatpush1.msra.mxu0 0.0
        %621 = vmatprep.subr.mxu0 0.0
        %622 = vmatpush1.msra.mxu0 0.0
        %623 = vmatprep.subr.mxu0 0.0
        %624 = vmatpush1.msra.mxu0 0.0
        %625 = vmatprep.subr.mxu0 0.0
        %626 = vmatpush1.msra.mxu0 0.0
        %627 = vmatprep.subr.mxu0 0.0
        %628 = vmatpush1.msra.mxu0 0.0
        %629 = vmatprep.subr.mxu0 0.0
        %630 = vmatpush1.msra.mxu0 0.0
        %631 = vmatprep.subr.mxu0 0.0
        %632 = vmatpush1.msra.mxu0 0.0
        %633 = vmatprep.subr.mxu0 0.0
        %634 = vmatpush1.msra.mxu0 0.0
        %635 = vmatprep.subr.mxu0 0.0
        %636 = vmatpush1.msra.mxu0 0.0
        %637 = vmatprep.mubr.f32.mxu0 0.0
        %638 = vmatmul.mubr.f32.gmra.mrb[0].mxu0 %v569
        %v639 = vpop.f32.mrb[0].mxu0
        %v640 = vadd.f32 0.0, %v639
        %v641 = vpop.f32.mrb[0].mxu0
        %642 = vdwg.mxu0
        %v643 = vadd.f32 %v563, %v640
        %s644 = scalar_lea.vmem %s1, 40
        %v645 = vld [vmem:[%s644] sm:$0xff]
        %646 = vrot.lane.b32.xlu0 %v246, 123
        %v647 = vpop.permute.xlu0 %646
        %v649 = vsel %vm252, %v645, 0
        %v651 = vsel %vm256, %v647, 0
        %653 = vmatprep.subr.mxu0 0.0
        %654 = vmatpush1.msra.mxu0 %v651
        %655 = vmatprep.subr.mxu0 0.0
        %656 = vmatpush1.msra.mxu0 0.0
        %657 = vmatprep.subr.mxu0 0.0
        %658 = vmatpush1.msra.mxu0 0.0
        %659 = vmatprep.subr.mxu0 0.0
        %660 = vmatpush1.msra.mxu0 0.0
        %661 = vmatprep.subr.mxu0 0.0
        %662 = vmatpush1.msra.mxu0 0.0
        %663 = vmatprep.subr.mxu0 0.0
        %664 = vmatpush1.msra.mxu0 0.0
        %665 = vmatprep.subr.mxu0 0.0
        %666 = vmatpush1.msra.mxu0 0.0
        %667 = vmatprep.subr.mxu0 0.0
        %668 = vmatpush1.msra.mxu0 0.0
        %669 = vmatprep.subr.mxu0 0.0
        %670 = vmatpush1.msra.mxu0 0.0
        %671 = vmatprep.subr.mxu0 0.0
        %672 = vmatpush1.msra.mxu0 0.0
        %673 = vmatprep.subr.mxu0 0.0
        %674 = vmatpush1.msra.mxu0 0.0
        %675 = vmatprep.subr.mxu0 0.0
        %676 = vmatpush1.msra.mxu0 0.0
        %677 = vmatprep.subr.mxu0 0.0
        %678 = vmatpush1.msra.mxu0 0.0
        %679 = vmatprep.subr.mxu0 0.0
        %680 = vmatpush1.msra.mxu0 0.0
        %681 = vmatprep.subr.mxu0 0.0
        %682 = vmatpush1.msra.mxu0 0.0
        %683 = vmatprep.subr.mxu0 0.0
        %684 = vmatpush1.msra.mxu0 0.0
        %685 = vmatprep.subr.mxu0 0.0
        %686 = vmatpush1.msra.mxu0 0.0
        %687 = vmatprep.subr.mxu0 0.0
        %688 = vmatpush1.msra.mxu0 0.0
        %689 = vmatprep.subr.mxu0 0.0
        %690 = vmatpush1.msra.mxu0 0.0
        %691 = vmatprep.subr.mxu0 0.0
        %692 = vmatpush1.msra.mxu0 0.0
        %693 = vmatprep.subr.mxu0 0.0
        %694 = vmatpush1.msra.mxu0 0.0
        %695 = vmatprep.subr.mxu0 0.0
        %696 = vmatpush1.msra.mxu0 0.0
        %697 = vmatprep.subr.mxu0 0.0
        %698 = vmatpush1.msra.mxu0 0.0
        %699 = vmatprep.subr.mxu0 0.0
        %700 = vmatpush1.msra.mxu0 0.0
        %701 = vmatprep.subr.mxu0 0.0
        %702 = vmatpush1.msra.mxu0 0.0
        %703 = vmatprep.subr.mxu0 0.0
        %704 = vmatpush1.msra.mxu0 0.0
        %705 = vmatprep.subr.mxu0 0.0
        %706 = vmatpush1.msra.mxu0 0.0
        %707 = vmatprep.subr.mxu0 0.0
        %708 = vmatpush1.msra.mxu0 0.0
        %709 = vmatprep.subr.mxu0 0.0
        %710 = vmatpush1.msra.mxu0 0.0
        %711 = vmatprep.subr.mxu0 0.0
        %712 = vmatpush1.msra.mxu0 0.0
        %713 = vmatprep.subr.mxu0 0.0
        %714 = vmatpush1.msra.mxu0 0.0
        %715 = vmatprep.subr.mxu0 0.0
        %716 = vmatpush1.msra.mxu0 0.0
        %717 = vmatprep.mubr.f32.mxu0 0.0
        %718 = vmatmul.mubr.f32.gmra.mrb[0].mxu0 %v649
        %v719 = vpop.f32.mrb[0].mxu0
        %v720 = vadd.f32 0.0, %v719
        %v721 = vpop.f32.mrb[0].mxu0
        %722 = vdwg.mxu0
        %v723 = vadd.f32 %v643, %v720
        %s724 = scalar_lea.vmem %s1, 48
        %v725 = vld [vmem:[%s724] sm:$0xff]
        %726 = vrot.lane.b32.xlu0 %v246, 122
        %v727 = vpop.permute.xlu0 %726
        %v729 = vsel %vm252, %v725, 0
        %v731 = vsel %vm256, %v727, 0
        %733 = vmatprep.subr.mxu0 0.0
        %734 = vmatpush1.msra.mxu0 %v731
        %735 = vmatprep.subr.mxu0 0.0
        %736 = vmatpush1.msra.mxu0 0.0
        %737 = vmatprep.subr.mxu0 0.0
        %738 = vmatpush1.msra.mxu0 0.0
        %739 = vmatprep.subr.mxu0 0.0
        %740 = vmatpush1.msra.mxu0 0.0
        %741 = vmatprep.subr.mxu0 0.0
        %742 = vmatpush1.msra.mxu0 0.0
        %743 = vmatprep.subr.mxu0 0.0
        %744 = vmatpush1.msra.mxu0 0.0
        %745 = vmatprep.subr.mxu0 0.0
        %746 = vmatpush1.msra.mxu0 0.0
        %747 = vmatprep.subr.mxu0 0.0
        %748 = vmatpush1.msra.mxu0 0.0
        %749 = vmatprep.subr.mxu0 0.0
        %750 = vmatpush1.msra.mxu0 0.0
        %751 = vmatprep.subr.mxu0 0.0
        %752 = vmatpush1.msra.mxu0 0.0
        %753 = vmatprep.subr.mxu0 0.0
        %754 = vmatpush1.msra.mxu0 0.0
        %755 = vmatprep.subr.mxu0 0.0
        %756 = vmatpush1.msra.mxu0 0.0
        %757 = vmatprep.subr.mxu0 0.0
        %758 = vmatpush1.msra.mxu0 0.0
        %759 = vmatprep.subr.mxu0 0.0
        %760 = vmatpush1.msra.mxu0 0.0
        %761 = vmatprep.subr.mxu0 0.0
        %762 = vmatpush1.msra.mxu0 0.0
        %763 = vmatprep.subr.mxu0 0.0
        %764 = vmatpush1.msra.mxu0 0.0
        %765 = vmatprep.subr.mxu0 0.0
        %766 = vmatpush1.msra.mxu0 0.0
        %767 = vmatprep.subr.mxu0 0.0
        %768 = vmatpush1.msra.mxu0 0.0
        %769 = vmatprep.subr.mxu0 0.0
        %770 = vmatpush1.msra.mxu0 0.0
        %771 = vmatprep.subr.mxu0 0.0
        %772 = vmatpush1.msra.mxu0 0.0
        %773 = vmatprep.subr.mxu0 0.0
        %774 = vmatpush1.msra.mxu0 0.0
        %775 = vmatprep.subr.mxu0 0.0
        %776 = vmatpush1.msra.mxu0 0.0
        %777 = vmatprep.subr.mxu0 0.0
        %778 = vmatpush1.msra.mxu0 0.0
        %779 = vmatprep.subr.mxu0 0.0
        %780 = vmatpush1.msra.mxu0 0.0
        %781 = vmatprep.subr.mxu0 0.0
        %782 = vmatpush1.msra.mxu0 0.0
        %783 = vmatprep.subr.mxu0 0.0
        %784 = vmatpush1.msra.mxu0 0.0
        %785 = vmatprep.subr.mxu0 0.0
        %786 = vmatpush1.msra.mxu0 0.0
        %787 = vmatprep.subr.mxu0 0.0
        %788 = vmatpush1.msra.mxu0 0.0
        %789 = vmatprep.subr.mxu0 0.0
        %790 = vmatpush1.msra.mxu0 0.0
        %791 = vmatprep.subr.mxu0 0.0
        %792 = vmatpush1.msra.mxu0 0.0
        %793 = vmatprep.subr.mxu0 0.0
        %794 = vmatpush1.msra.mxu0 0.0
        %795 = vmatprep.subr.mxu0 0.0
        %796 = vmatpush1.msra.mxu0 0.0
        %797 = vmatprep.mubr.f32.mxu0 0.0
        %798 = vmatmul.mubr.f32.gmra.mrb[0].mxu0 %v729
        %v799 = vpop.f32.mrb[0].mxu0
        %v800 = vadd.f32 0.0, %v799
        %v801 = vpop.f32.mrb[0].mxu0
        %802 = vdwg.mxu0
        %v803 = vadd.f32 %v723, %v800
        %s804 = scalar_lea.vmem %s1, 56
        %v805 = vld [vmem:[%s804] sm:$0xff]
        %806 = vrot.lane.b32.xlu0 %v246, 121
        %v807 = vpop.permute.xlu0 %806
        %v809 = vsel %vm252, %v805, 0
        %v811 = vsel %vm256, %v807, 0
        %813 = vmatprep.subr.mxu0 0.0
        %814 = vmatpush1.msra.mxu0 %v811
        %815 = vmatprep.subr.mxu0 0.0
        %816 = vmatpush1.msra.mxu0 0.0
        %817 = vmatprep.subr.mxu0 0.0
        %818 = vmatpush1.msra.mxu0 0.0
        %819 = vmatprep.subr.mxu0 0.0
        %820 = vmatpush1.msra.mxu0 0.0
        %821 = vmatprep.subr.mxu0 0.0
        %822 = vmatpush1.msra.mxu0 0.0
        %823 = vmatprep.subr.mxu0 0.0
        %824 = vmatpush1.msra.mxu0 0.0
        %825 = vmatprep.subr.mxu0 0.0
        %826 = vmatpush1.msra.mxu0 0.0
        %827 = vmatprep.subr.mxu0 0.0
        %828 = vmatpush1.msra.mxu0 0.0
        %829 = vmatprep.subr.mxu0 0.0
        %830 = vmatpush1.msra.mxu0 0.0
        %831 = vmatprep.subr.mxu0 0.0
        %832 = vmatpush1.msra.mxu0 0.0
        %833 = vmatprep.subr.mxu0 0.0
        %834 = vmatpush1.msra.mxu0 0.0
        %835 = vmatprep.subr.mxu0 0.0
        %836 = vmatpush1.msra.mxu0 0.0
        %837 = vmatprep.subr.mxu0 0.0
        %838 = vmatpush1.msra.mxu0 0.0
        %839 = vmatprep.subr.mxu0 0.0
        %840 = vmatpush1.msra.mxu0 0.0
        %841 = vmatprep.subr.mxu0 0.0
        %842 = vmatpush1.msra.mxu0 0.0
        %843 = vmatprep.subr.mxu0 0.0
        %844 = vmatpush1.msra.mxu0 0.0
        %845 = vmatprep.subr.mxu0 0.0
        %846 = vmatpush1.msra.mxu0 0.0
        %847 = vmatprep.subr.mxu0 0.0
        %848 = vmatpush1.msra.mxu0 0.0
        %849 = vmatprep.subr.mxu0 0.0
        %850 = vmatpush1.msra.mxu0 0.0
        %851 = vmatprep.subr.mxu0 0.0
        %852 = vmatpush1.msra.mxu0 0.0
        %853 = vmatprep.subr.mxu0 0.0
        %854 = vmatpush1.msra.mxu0 0.0
        %855 = vmatprep.subr.mxu0 0.0
        %856 = vmatpush1.msra.mxu0 0.0
        %857 = vmatprep.subr.mxu0 0.0
        %858 = vmatpush1.msra.mxu0 0.0
        %859 = vmatprep.subr.mxu0 0.0
        %860 = vmatpush1.msra.mxu0 0.0
        %861 = vmatprep.subr.mxu0 0.0
        %862 = vmatpush1.msra.mxu0 0.0
        %863 = vmatprep.subr.mxu0 0.0
        %864 = vmatpush1.msra.mxu0 0.0
        %865 = vmatprep.subr.mxu0 0.0
        %866 = vmatpush1.msra.mxu0 0.0
        %867 = vmatprep.subr.mxu0 0.0
        %868 = vmatpush1.msra.mxu0 0.0
        %869 = vmatprep.subr.mxu0 0.0
        %870 = vmatpush1.msra.mxu0 0.0
        %871 = vmatprep.subr.mxu0 0.0
        %872 = vmatpush1.msra.mxu0 0.0
        %873 = vmatprep.subr.mxu0 0.0
        %874 = vmatpush1.msra.mxu0 0.0
        %875 = vmatprep.subr.mxu0 0.0
        %876 = vmatpush1.msra.mxu0 0.0
        %877 = vmatprep.mubr.f32.mxu0 0.0
        %878 = vmatmul.mubr.f32.gmra.mrb[0].mxu0 %v809
        %v879 = vpop.f32.mrb[0].mxu0
        %v880 = vadd.f32 0.0, %v879
        %v881 = vpop.f32.mrb[0].mxu0
        %882 = vdwg.mxu0
        %v883 = vadd.f32 %v803, %v880
        %s884 = scalar_lea.vmem %s1, 64
        %v885 = vld [vmem:[%s884] sm:$0xff]
        %886 = vrot.lane.b32.xlu0 %v246, 120
        %v887 = vpop.permute.xlu0 %886
        %v889 = vsel %vm252, %v885, 0
        %v891 = vsel %vm256, %v887, 0
        %893 = vmatprep.subr.mxu0 0.0
        %894 = vmatpush1.msra.mxu0 %v891
        %895 = vmatprep.subr.mxu0 0.0
        %896 = vmatpush1.msra.mxu0 0.0
        %897 = vmatprep.subr.mxu0 0.0
        %898 = vmatpush1.msra.mxu0 0.0
        %899 = vmatprep.subr.mxu0 0.0
        %900 = vmatpush1.msra.mxu0 0.0
        %901 = vmatprep.subr.mxu0 0.0
        %902 = vmatpush1.msra.mxu0 0.0
        %903 = vmatprep.subr.mxu0 0.0
        %904 = vmatpush1.msra.mxu0 0.0
        %905 = vmatprep.subr.mxu0 0.0
        %906 = vmatpush1.msra.mxu0 0.0
        %907 = vmatprep.subr.mxu0 0.0
        %908 = vmatpush1.msra.mxu0 0.0
        %909 = vmatprep.subr.mxu0 0.0
        %910 = vmatpush1.msra.mxu0 0.0
        %911 = vmatprep.subr.mxu0 0.0
        %912 = vmatpush1.msra.mxu0 0.0
        %913 = vmatprep.subr.mxu0 0.0
        %914 = vmatpush1.msra.mxu0 0.0
        %915 = vmatprep.subr.mxu0 0.0
        %916 = vmatpush1.msra.mxu0 0.0
        %917 = vmatprep.subr.mxu0 0.0
        %918 = vmatpush1.msra.mxu0 0.0
        %919 = vmatprep.subr.mxu0 0.0
        %920 = vmatpush1.msra.mxu0 0.0
        %921 = vmatprep.subr.mxu0 0.0
        %922 = vmatpush1.msra.mxu0 0.0
        %923 = vmatprep.subr.mxu0 0.0
        %924 = vmatpush1.msra.mxu0 0.0
        %925 = vmatprep.subr.mxu0 0.0
        %926 = vmatpush1.msra.mxu0 0.0
        %927 = vmatprep.subr.mxu0 0.0
        %928 = vmatpush1.msra.mxu0 0.0
        %929 = vmatprep.subr.mxu0 0.0
        %930 = vmatpush1.msra.mxu0 0.0
        %931 = vmatprep.subr.mxu0 0.0
        %932 = vmatpush1.msra.mxu0 0.0
        %933 = vmatprep.subr.mxu0 0.0
        %934 = vmatpush1.msra.mxu0 0.0
        %935 = vmatprep.subr.mxu0 0.0
        %936 = vmatpush1.msra.mxu0 0.0
        %937 = vmatprep.subr.mxu0 0.0
        %938 = vmatpush1.msra.mxu0 0.0
        %939 = vmatprep.subr.mxu0 0.0
        %940 = vmatpush1.msra.mxu0 0.0
        %941 = vmatprep.subr.mxu0 0.0
        %942 = vmatpush1.msra.mxu0 0.0
        %943 = vmatprep.subr.mxu0 0.0
        %944 = vmatpush1.msra.mxu0 0.0
        %945 = vmatprep.subr.mxu0 0.0
        %946 = vmatpush1.msra.mxu0 0.0
        %947 = vmatprep.subr.mxu0 0.0
        %948 = vmatpush1.msra.mxu0 0.0
        %949 = vmatprep.subr.mxu0 0.0
        %950 = vmatpush1.msra.mxu0 0.0
        %951 = vmatprep.subr.mxu0 0.0
        %952 = vmatpush1.msra.mxu0 0.0
        %953 = vmatprep.subr.mxu0 0.0
        %954 = vmatpush1.msra.mxu0 0.0
        %955 = vmatprep.subr.mxu0 0.0
        %956 = vmatpush1.msra.mxu0 0.0
        %957 = vmatprep.mubr.f32.mxu0 0.0
        %958 = vmatmul.mubr.f32.gmra.mrb[0].mxu0 %v889
        %v959 = vpop.f32.mrb[0].mxu0
        %v960 = vadd.f32 0.0, %v959
        %v961 = vpop.f32.mrb[0].mxu0
        %962 = vdwg.mxu0
        %v963 = vadd.f32 %v883, %v960
        %v964 = vld [vmem:[%s2] sm:$0xff]
        %966 = vset.pattern.permute.xlu0 0
        %967 = vperm.xlu0 %966, %v964
        %v968 = vpop.permute.xlu0 %967
        %v970 = vadd.f32 %v963, %v968
        %v971 = vmax.f32 %v970, 0.0
        %vm972 = vcmask 195584
        %973 = vst.msk [vmem:[#allocation2] sm:$0xff] %vm972, %v971
        %p974 = scmp.eq.s32.totalorder %s24, 0
        // Predicated region
        $region41: #{unet_down.1} parent=39 // pred_check
          %p975 = pneg %p974
        $region42: #{unet_down.1} parent=39 // pred_check_branch
          %977 = sbr.rel (%p975) target = $region44
        $region43: #{unet_down.1} parent=39 // pred_region
          %v978 = vld [vmem:[#allocation2] sm:$0xff]
          %980 = vrot.lane.b32.xlu0 %v978, 126
          %v981 = vpop.permute.xlu0 %980
          %vm983 = vcmask 31768
          %984 = vst.msk [vmem:[#allocation2] sm:$0xff] %vm983, %v981
          %985 = vrot.lane.b32.xlu0 %v978, 124
          %v986 = vpop.permute.xlu0 %985
          %vm988 = vcmask 23568
          %989 = vst.msk [vmem:[#allocation2] sm:$0xff] %vm988, %v986
          %990 = vrot.lane.b32.xlu0 %v978, 122
          %v991 = vpop.permute.xlu0 %990
          %vm993 = vcmask 15368
          %994 = vst.msk [vmem:[#allocation2] sm:$0xff] %vm993, %v991
          %995 = vrot.lane.b32.xlu0 %v978, 120
          %v996 = vpop.permute.xlu0 %995
          %vm998 = vcmask 7168
          %999 = vst.msk [vmem:[#allocation2] sm:$0xff] %vm998, %v996
          %v1000 = vld [vmem:[#allocation2] sm:$0xff]
          %1002 = vrot.lane.b32.xlu0 %v1000, 2
          %v1003 = vpop.permute.xlu0 %1002
          %vm1005 = vcmask 171168
          %1006 = vst.msk [vmem:[#allocation2] sm:$0xff] %vm1005, %v1003
          %1007 = vrot.lane.b32.xlu0 %v1000, 4
          %v1008 = vpop.permute.xlu0 %1007
          %vm1010 = vcmask 179368
          %1011 = vst.msk [vmem:[#allocation2] sm:$0xff] %vm1010, %v1008
          %1012 = vrot.lane.b32.xlu0 %v1000, 6
          %v1013 = vpop.permute.xlu0 %1012
          %vm1015 = vcmask 187568
          %1016 = vst.msk [vmem:[#allocation2] sm:$0xff] %vm1015, %v1013
          %1017 = vrot.lane.b32.xlu0 %v1000, 8
          %v1018 = vpop.permute.xlu0 %1017
          %vm1020 = vcmask 195768
          %1021 = vst.msk [vmem:[#allocation2] sm:$0xff] %vm1020, %v1018
        $region44: #{unet_down.1} parent=39 // pred_fallthru
          _
        %v1022 = vld [vmem:[%s3] sm:$0xff]
        %v1023 = vld [vmem:[#allocation2] sm:$0xff]
        %s1024 = scalar_lea.vmem %s3, 8
        %v1025 = vld [vmem:[%s1024] sm:$0xff]
        %1027 = vrot.lane.b32.xlu0 %v1023, 127
        %v1028 = vpop.permute.xlu0 %1027
        %vm1030 = vcmask 64512
        %v1032 = vsel %vm1030, %v1025, 0
        %1034 = vmatprep.subr.mxu0 0.0
        %1035 = vmatpush1.msra.mxu0 %v1028
        %1036 = vmatprep.subr.mxu0 0.0
        %1037 = vmatpush1.msra.mxu0 0.0
        %1038 = vmatprep.subr.mxu0 0.0
        %1039 = vmatpush1.msra.mxu0 0.0
        %1040 = vmatprep.subr.mxu0 0.0
        %1041 = vmatpush1.msra.mxu0 0.0
        %1042 = vmatprep.subr.mxu0 0.0
        %1043 = vmatpush1.msra.mxu0 0.0
        %1044 = vmatprep.subr.mxu0 0.0
        %1045 = vmatpush1.msra.mxu0 0.0
        %1046 = vmatprep.subr.mxu0 0.0
        %1047 = vmatpush1.msra.mxu0 0.0
        %1048 = vmatprep.subr.mxu0 0.0
        %1049 = vmatpush1.msra.mxu0 0.0
        %1050 = vmatprep.subr.mxu0 0.0
        %1051 = vmatpush1.msra.mxu0 0.0
        %1052 = vmatprep.subr.mxu0 0.0
        %1053 = vmatpush1.msra.mxu0 0.0
        %1054 = vmatprep.subr.mxu0 0.0
        %1055 = vmatpush1.msra.mxu0 0.0
        %1056 = vmatprep.subr.mxu0 0.0
        %1057 = vmatpush1.msra.mxu0 0.0
        %1058 = vmatprep.subr.mxu0 0.0
        %1059 = vmatpush1.msra.mxu0 0.0
        %1060 = vmatprep.subr.mxu0 0.0
        %1061 = vmatpush1.msra.mxu0 0.0
        %1062 = vmatprep.subr.mxu0 0.0
        %1063 = vmatpush1.msra.mxu0 0.0
        %1064 = vmatprep.subr.mxu0 0.0
        %1065 = vmatpush1.msra.mxu0 0.0
        %1066 = vmatprep.subr.mxu0 0.0
        %1067 = vmatpush1.msra.mxu0 0.0
        %1068 = vmatprep.subr.mxu0 0.0
        %1069 = vmatpush1.msra.mxu0 0.0
        %1070 = vmatprep.subr.mxu0 0.0
        %1071 = vmatpush1.msra.mxu0 0.0
        %1072 = vmatprep.subr.mxu0 0.0
        %1073 = vmatpush1.msra.mxu0 0.0
        %1074 = vmatprep.subr.mxu0 0.0
        %1075 = vmatpush1.msra.mxu0 0.0
        %1076 = vmatprep.subr.mxu0 0.0
        %1077 = vmatpush1.msra.mxu0 0.0
        %1078 = vmatprep.subr.mxu0 0.0
        %1079 = vmatpush1.msra.mxu0 0.0
        %1080 = vmatprep.subr.mxu0 0.0
        %1081 = vmatpush1.msra.mxu0 0.0
        %1082 = vmatprep.subr.mxu0 0.0
        %1083 = vmatpush1.msra.mxu0 0.0
        %1084 = vmatprep.subr.mxu0 0.0
        %1085 = vmatpush1.msra.mxu0 0.0
        %1086 = vmatprep.subr.mxu0 0.0
        %1087 = vmatpush1.msra.mxu0 0.0
        %1088 = vmatprep.subr.mxu0 0.0
        %1089 = vmatpush1.msra.mxu0 0.0
        %1090 = vmatprep.subr.mxu0 0.0
        %1091 = vmatpush1.msra.mxu0 0.0
        %1092 = vmatprep.subr.mxu0 0.0
        %1093 = vmatpush1.msra.mxu0 0.0
        %1094 = vmatprep.subr.mxu0 0.0
        %1095 = vmatpush1.msra.mxu0 0.0
        %1096 = vmatprep.subr.mxu0 0.0
        %1097 = vmatpush1.msra.mxu0 0.0
        %1098 = vmatprep.mubr.f32.mxu0 0.0
        %1099 = vmatmul.mubr.f32.gmra.mrb[0].mxu0 %v1032
        %v1100 = vpop.f32.mrb[0].mxu0
        %v1101 = vadd.f32 0.0, %v1100
        %v1102 = vpop.f32.mrb[0].mxu0
        %1103 = vdwg.mxu0
        %v1105 = vsel %vm1030, %v1022, 0
        %1107 = vmatprep.subr.mxu0 0.0
        %1108 = vmatpush1.msra.mxu0 %v1023
        %1109 = vmatprep.subr.mxu0 0.0
        %1110 = vmatpush1.msra.mxu0 0.0
        %1111 = vmatprep.subr.mxu0 0.0
        %1112 = vmatpush1.msra.mxu0 0.0
        %1113 = vmatprep.subr.mxu0 0.0
        %1114 = vmatpush1.msra.mxu0 0.0
        %1115 = vmatprep.subr.mxu0 0.0
        %1116 = vmatpush1.msra.mxu0 0.0
        %1117 = vmatprep.subr.mxu0 0.0
        %1118 = vmatpush1.msra.mxu0 0.0
        %1119 = vmatprep.subr.mxu0 0.0
        %1120 = vmatpush1.msra.mxu0 0.0
        %1121 = vmatprep.subr.mxu0 0.0
        %1122 = vmatpush1.msra.mxu0 0.0
        %1123 = vmatprep.subr.mxu0 0.0
        %1124 = vmatpush1.msra.mxu0 0.0
        %1125 = vmatprep.subr.mxu0 0.0
        %1126 = vmatpush1.msra.mxu0 0.0
        %1127 = vmatprep.subr.mxu0 0.0
        %1128 = vmatpush1.msra.mxu0 0.0
        %1129 = vmatprep.subr.mxu0 0.0
        %1130 = vmatpush1.msra.mxu0 0.0
        %1131 = vmatprep.subr.mxu0 0.0
        %1132 = vmatpush1.msra.mxu0 0.0
        %1133 = vmatprep.subr.mxu0 0.0
        %1134 = vmatpush1.msra.mxu0 0.0
        %1135 = vmatprep.subr.mxu0 0.0
        %1136 = vmatpush1.msra.mxu0 0.0
        %1137 = vmatprep.subr.mxu0 0.0
        %1138 = vmatpush1.msra.mxu0 0.0
        %1139 = vmatprep.subr.mxu0 0.0
        %1140 = vmatpush1.msra.mxu0 0.0
        %1141 = vmatprep.subr.mxu0 0.0
        %1142 = vmatpush1.msra.mxu0 0.0
        %1143 = vmatprep.subr.mxu0 0.0
        %1144 = vmatpush1.msra.mxu0 0.0
        %1145 = vmatprep.subr.mxu0 0.0
        %1146 = vmatpush1.msra.mxu0 0.0
        %1147 = vmatprep.subr.mxu0 0.0
        %1148 = vmatpush1.msra.mxu0 0.0
        %1149 = vmatprep.subr.mxu0 0.0
        %1150 = vmatpush1.msra.mxu0 0.0
        %1151 = vmatprep.subr.mxu0 0.0
        %1152 = vmatpush1.msra.mxu0 0.0
        %1153 = vmatprep.subr.mxu0 0.0
        %1154 = vmatpush1.msra.mxu0 0.0
        %1155 = vmatprep.subr.mxu0 0.0
        %1156 = vmatpush1.msra.mxu0 0.0
        %1157 = vmatprep.subr.mxu0 0.0
        %1158 = vmatpush1.msra.mxu0 0.0
        %1159 = vmatprep.subr.mxu0 0.0
        %1160 = vmatpush1.msra.mxu0 0.0
        %1161 = vmatprep.subr.mxu0 0.0
        %1162 = vmatpush1.msra.mxu0 0.0
        %1163 = vmatprep.subr.mxu0 0.0
        %1164 = vmatpush1.msra.mxu0 0.0
        %1165 = vmatprep.subr.mxu0 0.0
        %1166 = vmatpush1.msra.mxu0 0.0
        %1167 = vmatprep.subr.mxu0 0.0
        %1168 = vmatpush1.msra.mxu0 0.0
        %1169 = vmatprep.subr.mxu0 0.0
        %1170 = vmatpush1.msra.mxu0 0.0
        %1171 = vmatprep.mubr.f32.mxu0 0.0
        %1172 = vmatmul.mubr.f32.gmra.mrb[0].mxu0 %v1105
        %v1173 = vpop.f32.mrb[0].mxu0
        %v1174 = vadd.f32 %v1101, %v1173
        %v1175 = vpop.f32.mrb[0].mxu0
        %1176 = vdwg.mxu0
        %s1177 = scalar_lea.vmem %s3, 16
        %v1178 = vld [vmem:[%s1177] sm:$0xff]
        %1179 = vrot.lane.b32.xlu0 %v1023, 126
        %v1180 = vpop.permute.xlu0 %1179
        %v1183 = vsel %vm1030, %v1178, 0
        %1185 = vmatprep.subr.mxu0 0.0
        %1186 = vmatpush1.msra.mxu0 %v1180
        %1187 = vmatprep.subr.mxu0 0.0
        %1188 = vmatpush1.msra.mxu0 0.0
        %1189 = vmatprep.subr.mxu0 0.0
        %1190 = vmatpush1.msra.mxu0 0.0
        %1191 = vmatprep.subr.mxu0 0.0
        %1192 = vmatpush1.msra.mxu0 0.0
        %1193 = vmatprep.subr.mxu0 0.0
        %1194 = vmatpush1.msra.mxu0 0.0
        %1195 = vmatprep.subr.mxu0 0.0
        %1196 = vmatpush1.msra.mxu0 0.0
        %1197 = vmatprep.subr.mxu0 0.0
        %1198 = vmatpush1.msra.mxu0 0.0
        %1199 = vmatprep.subr.mxu0 0.0
        %1200 = vmatpush1.msra.mxu0 0.0
        %1201 = vmatprep.subr.mxu0 0.0
        %1202 = vmatpush1.msra.mxu0 0.0
        %1203 = vmatprep.subr.mxu0 0.0
        %1204 = vmatpush1.msra.mxu0 0.0
        %1205 = vmatprep.subr.mxu0 0.0
        %1206 = vmatpush1.msra.mxu0 0.0
        %1207 = vmatprep.subr.mxu0 0.0
        %1208 = vmatpush1.msra.mxu0 0.0
        %1209 = vmatprep.subr.mxu0 0.0
        %1210 = vmatpush1.msra.mxu0 0.0
        %1211 = vmatprep.subr.mxu0 0.0
        %1212 = vmatpush1.msra.mxu0 0.0
        %1213 = vmatprep.subr.mxu0 0.0
        %1214 = vmatpush1.msra.mxu0 0.0
        %1215 = vmatprep.subr.mxu0 0.0
        %1216 = vmatpush1.msra.mxu0 0.0
        %1217 = vmatprep.subr.mxu0 0.0
        %1218 = vmatpush1.msra.mxu0 0.0
        %1219 = vmatprep.subr.mxu0 0.0
        %1220 = vmatpush1.msra.mxu0 0.0
        %1221 = vmatprep.subr.mxu0 0.0
        %1222 = vmatpush1.msra.mxu0 0.0
        %1223 = vmatprep.subr.mxu0 0.0
        %1224 = vmatpush1.msra.mxu0 0.0
        %1225 = vmatprep.subr.mxu0 0.0
        %1226 = vmatpush1.msra.mxu0 0.0
        %1227 = vmatprep.subr.mxu0 0.0
        %1228 = vmatpush1.msra.mxu0 0.0
        %1229 = vmatprep.subr.mxu0 0.0
        %1230 = vmatpush1.msra.mxu0 0.0
        %1231 = vmatprep.subr.mxu0 0.0
        %1232 = vmatpush1.msra.mxu0 0.0
        %1233 = vmatprep.subr.mxu0 0.0
        %1234 = vmatpush1.msra.mxu0 0.0
        %1235 = vmatprep.subr.mxu0 0.0
        %1236 = vmatpush1.msra.mxu0 0.0
        %1237 = vmatprep.subr.mxu0 0.0
        %1238 = vmatpush1.msra.mxu0 0.0
        %1239 = vmatprep.subr.mxu0 0.0
        %1240 = vmatpush1.msra.mxu0 0.0
        %1241 = vmatprep.subr.mxu0 0.0
        %1242 = vmatpush1.msra.mxu0 0.0
        %1243 = vmatprep.subr.mxu0 0.0
        %1244 = vmatpush1.msra.mxu0 0.0
        %1245 = vmatprep.subr.mxu0 0.0
        %1246 = vmatpush1.msra.mxu0 0.0
        %1247 = vmatprep.subr.mxu0 0.0
        %1248 = vmatpush1.msra.mxu0 0.0
        %1249 = vmatprep.mubr.f32.mxu0 0.0
        %1250 = vmatmul.mubr.f32.gmra.mrb[0].mxu0 %v1183
        %v1251 = vpop.f32.mrb[0].mxu0
        %v1252 = vadd.f32 0.0, %v1251
        %v1253 = vpop.f32.mrb[0].mxu0
        %1254 = vdwg.mxu0
        %v1255 = vadd.f32 %v1174, %v1252
        %s1256 = scalar_lea.vmem %s3, 24
        %v1257 = vld [vmem:[%s1256] sm:$0xff]
        %1258 = vrot.lane.b32.xlu0 %v1023, 125
        %v1259 = vpop.permute.xlu0 %1258
        %v1262 = vsel %vm1030, %v1257, 0
        %1264 = vmatprep.subr.mxu0 0.0
        %1265 = vmatpush1.msra.mxu0 %v1259
        %1266 = vmatprep.subr.mxu0 0.0
        %1267 = vmatpush1.msra.mxu0 0.0
        %1268 = vmatprep.subr.mxu0 0.0
        %1269 = vmatpush1.msra.mxu0 0.0
        %1270 = vmatprep.subr.mxu0 0.0
        %1271 = vmatpush1.msra.mxu0 0.0
        %1272 = vmatprep.subr.mxu0 0.0
        %1273 = vmatpush1.msra.mxu0 0.0
        %1274 = vmatprep.subr.mxu0 0.0
        %1275 = vmatpush1.msra.mxu0 0.0
        %1276 = vmatprep.subr.mxu0 0.0
        %1277 = vmatpush1.msra.mxu0 0.0
        %1278 = vmatprep.subr.mxu0 0.0
        %1279 = vmatpush1.msra.mxu0 0.0
        %1280 = vmatprep.subr.mxu0 0.0
        %1281 = vmatpush1.msra.mxu0 0.0
        %1282 = vmatprep.subr.mxu0 0.0
        %1283 = vmatpush1.msra.mxu0 0.0
        %1284 = vmatprep.subr.mxu0 0.0
        %1285 = vmatpush1.msra.mxu0 0.0
        %1286 = vmatprep.subr.mxu0 0.0
        %1287 = vmatpush1.msra.mxu0 0.0
        %1288 = vmatprep.subr.mxu0 0.0
        %1289 = vmatpush1.msra.mxu0 0.0
        %1290 = vmatprep.subr.mxu0 0.0
        %1291 = vmatpush1.msra.mxu0 0.0
        %1292 = vmatprep.subr.mxu0 0.0
        %1293 = vmatpush1.msra.mxu0 0.0
        %1294 = vmatprep.subr.mxu0 0.0
        %1295 = vmatpush1.msra.mxu0 0.0
        %1296 = vmatprep.subr.mxu0 0.0
        %1297 = vmatpush1.msra.mxu0 0.0
        %1298 = vmatprep.subr.mxu0 0.0
        %1299 = vmatpush1.msra.mxu0 0.0
        %1300 = vmatprep.subr.mxu0 0.0
        %1301 = vmatpush1.msra.mxu0 0.0
        %1302 = vmatprep.subr.mxu0 0.0
        %1303 = vmatpush1.msra.mxu0 0.0
        %1304 = vmatprep.subr.mxu0 0.0
        %1305 = vmatpush1.msra.mxu0 0.0
        %1306 = vmatprep.subr.mxu0 0.0
        %1307 = vmatpush1.msra.mxu0 0.0
        %1308 = vmatprep.subr.mxu0 0.0
        %1309 = vmatpush1.msra.mxu0 0.0
        %1310 = vmatprep.subr.mxu0 0.0
        %1311 = vmatpush1.msra.mxu0 0.0
        %1312 = vmatprep.subr.mxu0 0.0
        %1313 = vmatpush1.msra.mxu0 0.0
        %1314 = vmatprep.subr.mxu0 0.0
        %1315 = vmatpush1.msra.mxu0 0.0
        %1316 = vmatprep.subr.mxu0 0.0
        %1317 = vmatpush1.msra.mxu0 0.0
        %1318 = vmatprep.subr.mxu0 0.0
        %1319 = vmatpush1.msra.mxu0 0.0
        %1320 = vmatprep.subr.mxu0 0.0
        %1321 = vmatpush1.msra.mxu0 0.0
        %1322 = vmatprep.subr.mxu0 0.0
        %1323 = vmatpush1.msra.mxu0 0.0
        %1324 = vmatprep.subr.mxu0 0.0
        %1325 = vmatpush1.msra.mxu0 0.0
        %1326 = vmatprep.subr.mxu0 0.0
        %1327 = vmatpush1.msra.mxu0 0.0
        %1328 = vmatprep.mubr.f32.mxu0 0.0
        %1329 = vmatmul.mubr.f32.gmra.mrb[0].mxu0 %v1262
        %v1330 = vpop.f32.mrb[0].mxu0
        %v1331 = vadd.f32 0.0, %v1330
        %v1332 = vpop.f32.mrb[0].mxu0
        %1333 = vdwg.mxu0
        %v1334 = vadd.f32 %v1255, %v1331
        %s1335 = scalar_lea.vmem %s3, 32
        %v1336 = vld [vmem:[%s1335] sm:$0xff]
        %1337 = vrot.lane.b32.xlu0 %v1023, 124
        %v1338 = vpop.permute.xlu0 %1337
        %v1341 = vsel %vm1030, %v1336, 0
        %1343 = vmatprep.subr.mxu0 0.0
        %1344 = vmatpush1.msra.mxu0 %v1338
        %1345 = vmatprep.subr.mxu0 0.0
        %1346 = vmatpush1.msra.mxu0 0.0
        %1347 = vmatprep.subr.mxu0 0.0
        %1348 = vmatpush1.msra.mxu0 0.0
        %1349 = vmatprep.subr.mxu0 0.0
        %1350 = vmatpush1.msra.mxu0 0.0
        %1351 = vmatprep.subr.mxu0 0.0
        %1352 = vmatpush1.msra.mxu0 0.0
        %1353 = vmatprep.subr.mxu0 0.0
        %1354 = vmatpush1.msra.mxu0 0.0
        %1355 = vmatprep.subr.mxu0 0.0
        %1356 = vmatpush1.msra.mxu0 0.0
        %1357 = vmatprep.subr.mxu0 0.0
        %1358 = vmatpush1.msra.mxu0 0.0
        %1359 = vmatprep.subr.mxu0 0.0
        %1360 = vmatpush1.msra.mxu0 0.0
        %1361 = vmatprep.subr.mxu0 0.0
        %1362 = vmatpush1.msra.mxu0 0.0
        %1363 = vmatprep.subr.mxu0 0.0
        %1364 = vmatpush1.msra.mxu0 0.0
        %1365 = vmatprep.subr.mxu0 0.0
        %1366 = vmatpush1.msra.mxu0 0.0
        %1367 = vmatprep.subr.mxu0 0.0
        %1368 = vmatpush1.msra.mxu0 0.0
        %1369 = vmatprep.subr.mxu0 0.0
        %1370 = vmatpush1.msra.mxu0 0.0
        %1371 = vmatprep.subr.mxu0 0.0
        %1372 = vmatpush1.msra.mxu0 0.0
        %1373 = vmatprep.subr.mxu0 0.0
        %1374 = vmatpush1.msra.mxu0 0.0
        %1375 = vmatprep.subr.mxu0 0.0
        %1376 = vmatpush1.msra.mxu0 0.0
        %1377 = vmatprep.subr.mxu0 0.0
        %1378 = vmatpush1.msra.mxu0 0.0
        %1379 = vmatprep.subr.mxu0 0.0
        %1380 = vmatpush1.msra.mxu0 0.0
        %1381 = vmatprep.subr.mxu0 0.0
        %1382 = vmatpush1.msra.mxu0 0.0
        %1383 = vmatprep.subr.mxu0 0.0
        %1384 = vmatpush1.msra.mxu0 0.0
        %1385 = vmatprep.subr.mxu0 0.0
        %1386 = vmatpush1.msra.mxu0 0.0
        %1387 = vmatprep.subr.mxu0 0.0
        %1388 = vmatpush1.msra.mxu0 0.0
        %1389 = vmatprep.subr.mxu0 0.0
        %1390 = vmatpush1.msra.mxu0 0.0
        %1391 = vmatprep.subr.mxu0 0.0
        %1392 = vmatpush1.msra.mxu0 0.0
        %1393 = vmatprep.subr.mxu0 0.0
        %1394 = vmatpush1.msra.mxu0 0.0
        %1395 = vmatprep.subr.mxu0 0.0
        %1396 = vmatpush1.msra.mxu0 0.0
        %1397 = vmatprep.subr.mxu0 0.0
        %1398 = vmatpush1.msra.mxu0 0.0
        %1399 = vmatprep.subr.mxu0 0.0
        %1400 = vmatpush1.msra.mxu0 0.0
        %1401 = vmatprep.subr.mxu0 0.0
        %1402 = vmatpush1.msra.mxu0 0.0
        %1403 = vmatprep.subr.mxu0 0.0
        %1404 = vmatpush1.msra.mxu0 0.0
        %1405 = vmatprep.subr.mxu0 0.0
        %1406 = vmatpush1.msra.mxu0 0.0
        %1407 = vmatprep.mubr.f32.mxu0 0.0
        %1408 = vmatmul.mubr.f32.gmra.mrb[0].mxu0 %v1341
        %v1409 = vpop.f32.mrb[0].mxu0
        %v1410 = vadd.f32 0.0, %v1409
        %v1411 = vpop.f32.mrb[0].mxu0
        %1412 = vdwg.mxu0
        %v1413 = vadd.f32 %v1334, %v1410
        %s1414 = scalar_lea.vmem %s3, 40
        %v1415 = vld [vmem:[%s1414] sm:$0xff]
        %1416 = vrot.lane.b32.xlu0 %v1023, 123
        %v1417 = vpop.permute.xlu0 %1416
        %v1420 = vsel %vm1030, %v1415, 0
        %1422 = vmatprep.subr.mxu0 0.0
        %1423 = vmatpush1.msra.mxu0 %v1417
        %1424 = vmatprep.subr.mxu0 0.0
        %1425 = vmatpush1.msra.mxu0 0.0
        %1426 = vmatprep.subr.mxu0 0.0
        %1427 = vmatpush1.msra.mxu0 0.0
        %1428 = vmatprep.subr.mxu0 0.0
        %1429 = vmatpush1.msra.mxu0 0.0
        %1430 = vmatprep.subr.mxu0 0.0
        %1431 = vmatpush1.msra.mxu0 0.0
        %1432 = vmatprep.subr.mxu0 0.0
        %1433 = vmatpush1.msra.mxu0 0.0
        %1434 = vmatprep.subr.mxu0 0.0
        %1435 = vmatpush1.msra.mxu0 0.0
        %1436 = vmatprep.subr.mxu0 0.0
        %1437 = vmatpush1.msra.mxu0 0.0
        %1438 = vmatprep.subr.mxu0 0.0
        %1439 = vmatpush1.msra.mxu0 0.0
        %1440 = vmatprep.subr.mxu0 0.0
        %1441 = vmatpush1.msra.mxu0 0.0
        %1442 = vmatprep.subr.mxu0 0.0
        %1443 = vmatpush1.msra.mxu0 0.0
        %1444 = vmatprep.subr.mxu0 0.0
        %1445 = vmatpush1.msra.mxu0 0.0
        %1446 = vmatprep.subr.mxu0 0.0
        %1447 = vmatpush1.msra.mxu0 0.0
        %1448 = vmatprep.subr.mxu0 0.0
        %1449 = vmatpush1.msra.mxu0 0.0
        %1450 = vmatprep.subr.mxu0 0.0
        %1451 = vmatpush1.msra.mxu0 0.0
        %1452 = vmatprep.subr.mxu0 0.0
        %1453 = vmatpush1.msra.mxu0 0.0
        %1454 = vmatprep.subr.mxu0 0.0
        %1455 = vmatpush1.msra.mxu0 0.0
        %1456 = vmatprep.subr.mxu0 0.0
        %1457 = vmatpush1.msra.mxu0 0.0
        %1458 = vmatprep.subr.mxu0 0.0
        %1459 = vmatpush1.msra.mxu0 0.0
        %1460 = vmatprep.subr.mxu0 0.0
        %1461 = vmatpush1.msra.mxu0 0.0
        %1462 = vmatprep.subr.mxu0 0.0
        %1463 = vmatpush1.msra.mxu0 0.0
        %1464 = vmatprep.subr.mxu0 0.0
        %1465 = vmatpush1.msra.mxu0 0.0
        %1466 = vmatprep.subr.mxu0 0.0
        %1467 = vmatpush1.msra.mxu0 0.0
        %1468 = vmatprep.subr.mxu0 0.0
        %1469 = vmatpush1.msra.mxu0 0.0
        %1470 = vmatprep.subr.mxu0 0.0
        %1471 = vmatpush1.msra.mxu0 0.0
        %1472 = vmatprep.subr.mxu0 0.0
        %1473 = vmatpush1.msra.mxu0 0.0
        %1474 = vmatprep.subr.mxu0 0.0
        %1475 = vmatpush1.msra.mxu0 0.0
        %1476 = vmatprep.subr.mxu0 0.0
        %1477 = vmatpush1.msra.mxu0 0.0
        %1478 = vmatprep.subr.mxu0 0.0
        %1479 = vmatpush1.msra.mxu0 0.0
        %1480 = vmatprep.subr.mxu0 0.0
        %1481 = vmatpush1.msra.mxu0 0.0
        %1482 = vmatprep.subr.mxu0 0.0
        %1483 = vmatpush1.msra.mxu0 0.0
        %1484 = vmatprep.subr.mxu0 0.0
        %1485 = vmatpush1.msra.mxu0 0.0
        %1486 = vmatprep.mubr.f32.mxu0 0.0
        %1487 = vmatmul.mubr.f32.gmra.mrb[0].mxu0 %v1420
        %v1488 = vpop.f32.mrb[0].mxu0
        %v1489 = vadd.f32 0.0, %v1488
        %v1490 = vpop.f32.mrb[0].mxu0
        %1491 = vdwg.mxu0
        %v1492 = vadd.f32 %v1413, %v1489
        %s1493 = scalar_lea.vmem %s3, 48
        %v1494 = vld [vmem:[%s1493] sm:$0xff]
        %1495 = vrot.lane.b32.xlu0 %v1023, 122
        %v1496 = vpop.permute.xlu0 %1495
        %v1499 = vsel %vm1030, %v1494, 0
        %1501 = vmatprep.subr.mxu0 0.0
        %1502 = vmatpush1.msra.mxu0 %v1496
        %1503 = vmatprep.subr.mxu0 0.0
        %1504 = vmatpush1.msra.mxu0 0.0
        %1505 = vmatprep.subr.mxu0 0.0
        %1506 = vmatpush1.msra.mxu0 0.0
        %1507 = vmatprep.subr.mxu0 0.0
        %1508 = vmatpush1.msra.mxu0 0.0
        %1509 = vmatprep.subr.mxu0 0.0
        %1510 = vmatpush1.msra.mxu0 0.0
        %1511 = vmatprep.subr.mxu0 0.0
        %1512 = vmatpush1.msra.mxu0 0.0
        %1513 = vmatprep.subr.mxu0 0.0
        %1514 = vmatpush1.msra.mxu0 0.0
        %1515 = vmatprep.subr.mxu0 0.0
        %1516 = vmatpush1.msra.mxu0 0.0
        %1517 = vmatprep.subr.mxu0 0.0
        %1518 = vmatpush1.msra.mxu0 0.0
        %1519 = vmatprep.subr.mxu0 0.0
        %1520 = vmatpush1.msra.mxu0 0.0
        %1521 = vmatprep.subr.mxu0 0.0
        %1522 = vmatpush1.msra.mxu0 0.0
        %1523 = vmatprep.subr.mxu0 0.0
        %1524 = vmatpush1.msra.mxu0 0.0
        %1525 = vmatprep.subr.mxu0 0.0
        %1526 = vmatpush1.msra.mxu0 0.0
        %1527 = vmatprep.subr.mxu0 0.0
        %1528 = vmatpush1.msra.mxu0 0.0
        %1529 = vmatprep.subr.mxu0 0.0
        %1530 = vmatpush1.msra.mxu0 0.0
        %1531 = vmatprep.subr.mxu0 0.0
        %1532 = vmatpush1.msra.mxu0 0.0
        %1533 = vmatprep.subr.mxu0 0.0
        %1534 = vmatpush1.msra.mxu0 0.0
        %1535 = vmatprep.subr.mxu0 0.0
        %1536 = vmatpush1.msra.mxu0 0.0
        %1537 = vmatprep.subr.mxu0 0.0
        %1538 = vmatpush1.msra.mxu0 0.0
        %1539 = vmatprep.subr.mxu0 0.0
        %1540 = vmatpush1.msra.mxu0 0.0
        %1541 = vmatprep.subr.mxu0 0.0
        %1542 = vmatpush1.msra.mxu0 0.0
        %1543 = vmatprep.subr.mxu0 0.0
        %1544 = vmatpush1.msra.mxu0 0.0
        %1545 = vmatprep.subr.mxu0 0.0
        %1546 = vmatpush1.msra.mxu0 0.0
        %1547 = vmatprep.subr.mxu0 0.0
        %1548 = vmatpush1.msra.mxu0 0.0
        %1549 = vmatprep.subr.mxu0 0.0
        %1550 = vmatpush1.msra.mxu0 0.0
        %1551 = vmatprep.subr.mxu0 0.0
        %1552 = vmatpush1.msra.mxu0 0.0
        %1553 = vmatprep.subr.mxu0 0.0
        %1554 = vmatpush1.msra.mxu0 0.0
        %1555 = vmatprep.subr.mxu0 0.0
        %1556 = vmatpush1.msra.mxu0 0.0
        %1557 = vmatprep.subr.mxu0 0.0
        %1558 = vmatpush1.msra.mxu0 0.0
        %1559 = vmatprep.subr.mxu0 0.0
        %1560 = vmatpush1.msra.mxu0 0.0
        %1561 = vmatprep.subr.mxu0 0.0
        %1562 = vmatpush1.msra.mxu0 0.0
        %1563 = vmatprep.subr.mxu0 0.0
        %1564 = vmatpush1.msra.mxu0 0.0
        %1565 = vmatprep.mubr.f32.mxu0 0.0
        %1566 = vmatmul.mubr.f32.gmra.mrb[0].mxu0 %v1499
        %v1567 = vpop.f32.mrb[0].mxu0
        %v1568 = vadd.f32 0.0, %v1567
        %v1569 = vpop.f32.mrb[0].mxu0
        %1570 = vdwg.mxu0
        %v1571 = vadd.f32 %v1492, %v1568
        %s1572 = scalar_lea.vmem %s3, 56
        %v1573 = vld [vmem:[%s1572] sm:$0xff]
        %1574 = vrot.lane.b32.xlu0 %v1023, 121
        %v1575 = vpop.permute.xlu0 %1574
        %v1578 = vsel %vm1030, %v1573, 0
        %1580 = vmatprep.subr.mxu0 0.0
        %1581 = vmatpush1.msra.mxu0 %v1575
        %1582 = vmatprep.subr.mxu0 0.0
        %1583 = vmatpush1.msra.mxu0 0.0
        %1584 = vmatprep.subr.mxu0 0.0
        %1585 = vmatpush1.msra.mxu0 0.0
        %1586 = vmatprep.subr.mxu0 0.0
        %1587 = vmatpush1.msra.mxu0 0.0
        %1588 = vmatprep.subr.mxu0 0.0
        %1589 = vmatpush1.msra.mxu0 0.0
        %1590 = vmatprep.subr.mxu0 0.0
        %1591 = vmatpush1.msra.mxu0 0.0
        %1592 = vmatprep.subr.mxu0 0.0
        %1593 = vmatpush1.msra.mxu0 0.0
        %1594 = vmatprep.subr.mxu0 0.0
        %1595 = vmatpush1.msra.mxu0 0.0
        %1596 = vmatprep.subr.mxu0 0.0
        %1597 = vmatpush1.msra.mxu0 0.0
        %1598 = vmatprep.subr.mxu0 0.0
        %1599 = vmatpush1.msra.mxu0 0.0
        %1600 = vmatprep.subr.mxu0 0.0
        %1601 = vmatpush1.msra.mxu0 0.0
        %1602 = vmatprep.subr.mxu0 0.0
        %1603 = vmatpush1.msra.mxu0 0.0
        %1604 = vmatprep.subr.mxu0 0.0
        %1605 = vmatpush1.msra.mxu0 0.0
        %1606 = vmatprep.subr.mxu0 0.0
        %1607 = vmatpush1.msra.mxu0 0.0
        %1608 = vmatprep.subr.mxu0 0.0
        %1609 = vmatpush1.msra.mxu0 0.0
        %1610 = vmatprep.subr.mxu0 0.0
        %1611 = vmatpush1.msra.mxu0 0.0
        %1612 = vmatprep.subr.mxu0 0.0
        %1613 = vmatpush1.msra.mxu0 0.0
        %1614 = vmatprep.subr.mxu0 0.0
        %1615 = vmatpush1.msra.mxu0 0.0
        %1616 = vmatprep.subr.mxu0 0.0
        %1617 = vmatpush1.msra.mxu0 0.0
        %1618 = vmatprep.subr.mxu0 0.0
        %1619 = vmatpush1.msra.mxu0 0.0
        %1620 = vmatprep.subr.mxu0 0.0
        %1621 = vmatpush1.msra.mxu0 0.0
        %1622 = vmatprep.subr.mxu0 0.0
        %1623 = vmatpush1.msra.mxu0 0.0
        %1624 = vmatprep.subr.mxu0 0.0
        %1625 = vmatpush1.msra.mxu0 0.0
        %1626 = vmatprep.subr.mxu0 0.0
        %1627 = vmatpush1.msra.mxu0 0.0
        %1628 = vmatprep.subr.mxu0 0.0
        %1629 = vmatpush1.msra.mxu0 0.0
        %1630 = vmatprep.subr.mxu0 0.0
        %1631 = vmatpush1.msra.mxu0 0.0
        %1632 = vmatprep.subr.mxu0 0.0
        %1633 = vmatpush1.msra.mxu0 0.0
        %1634 = vmatprep.subr.mxu0 0.0
        %1635 = vmatpush1.msra.mxu0 0.0
        %1636 = vmatprep.subr.mxu0 0.0
        %1637 = vmatpush1.msra.mxu0 0.0
        %1638 = vmatprep.subr.mxu0 0.0
        %1639 = vmatpush1.msra.mxu0 0.0
        %1640 = vmatprep.subr.mxu0 0.0
        %1641 = vmatpush1.msra.mxu0 0.0
        %1642 = vmatprep.subr.mxu0 0.0
        %1643 = vmatpush1.msra.mxu0 0.0
        %1644 = vmatprep.mubr.f32.mxu0 0.0
        %1645 = vmatmul.mubr.f32.gmra.mrb[0].mxu0 %v1578
        %v1646 = vpop.f32.mrb[0].mxu0
        %v1647 = vadd.f32 0.0, %v1646
        %v1648 = vpop.f32.mrb[0].mxu0
        %1649 = vdwg.mxu0
        %v1650 = vadd.f32 %v1571, %v1647
        %s1651 = scalar_lea.vmem %s3, 64
        %v1652 = vld [vmem:[%s1651] sm:$0xff]
        %1653 = vrot.lane.b32.xlu0 %v1023, 120
        %v1654 = vpop.permute.xlu0 %1653
        %v1657 = vsel %vm1030, %v1652, 0
        %1659 = vmatprep.subr.mxu0 0.0
        %1660 = vmatpush1.msra.mxu0 %v1654
        %1661 = vmatprep.subr.mxu0 0.0
        %1662 = vmatpush1.msra.mxu0 0.0
        %1663 = vmatprep.subr.mxu0 0.0
        %1664 = vmatpush1.msra.mxu0 0.0
        %1665 = vmatprep.subr.mxu0 0.0
        %1666 = vmatpush1.msra.mxu0 0.0
        %1667 = vmatprep.subr.mxu0 0.0
        %1668 = vmatpush1.msra.mxu0 0.0
        %1669 = vmatprep.subr.mxu0 0.0
        %1670 = vmatpush1.msra.mxu0 0.0
        %1671 = vmatprep.subr.mxu0 0.0
        %1672 = vmatpush1.msra.mxu0 0.0
        %1673 = vmatprep.subr.mxu0 0.0
        %1674 = vmatpush1.msra.mxu0 0.0
        %1675 = vmatprep.subr.mxu0 0.0
        %1676 = vmatpush1.msra.mxu0 0.0
        %1677 = vmatprep.subr.mxu0 0.0
        %1678 = vmatpush1.msra.mxu0 0.0
        %1679 = vmatprep.subr.mxu0 0.0
        %1680 = vmatpush1.msra.mxu0 0.0
        %1681 = vmatprep.subr.mxu0 0.0
        %1682 = vmatpush1.msra.mxu0 0.0
        %1683 = vmatprep.subr.mxu0 0.0
        %1684 = vmatpush1.msra.mxu0 0.0
        %1685 = vmatprep.subr.mxu0 0.0
        %1686 = vmatpush1.msra.mxu0 0.0
        %1687 = vmatprep.subr.mxu0 0.0
        %1688 = vmatpush1.msra.mxu0 0.0
        %1689 = vmatprep.subr.mxu0 0.0
        %1690 = vmatpush1.msra.mxu0 0.0
        %1691 = vmatprep.subr.mxu0 0.0
        %1692 = vmatpush1.msra.mxu0 0.0
        %1693 = vmatprep.subr.mxu0 0.0
        %1694 = vmatpush1.msra.mxu0 0.0
        %1695 = vmatprep.subr.mxu0 0.0
        %1696 = vmatpush1.msra.mxu0 0.0
        %1697 = vmatprep.subr.mxu0 0.0
        %1698 = vmatpush1.msra.mxu0 0.0
        %1699 = vmatprep.subr.mxu0 0.0
        %1700 = vmatpush1.msra.mxu0 0.0
        %1701 = vmatprep.subr.mxu0 0.0
        %1702 = vmatpush1.msra.mxu0 0.0
        %1703 = vmatprep.subr.mxu0 0.0
        %1704 = vmatpush1.msra.mxu0 0.0
        %1705 = vmatprep.subr.mxu0 0.0
        %1706 = vmatpush1.msra.mxu0 0.0
        %1707 = vmatprep.subr.mxu0 0.0
        %1708 = vmatpush1.msra.mxu0 0.0
        %1709 = vmatprep.subr.mxu0 0.0
        %1710 = vmatpush1.msra.mxu0 0.0
        %1711 = vmatprep.subr.mxu0 0.0
        %1712 = vmatpush1.msra.mxu0 0.0
        %1713 = vmatprep.subr.mxu0 0.0
        %1714 = vmatpush1.msra.mxu0 0.0
        %1715 = vmatprep.subr.mxu0 0.0
        %1716 = vmatpush1.msra.mxu0 0.0
        %1717 = vmatprep.subr.mxu0 0.0
        %1718 = vmatpush1.msra.mxu0 0.0
        %1719 = vmatprep.subr.mxu0 0.0
        %1720 = vmatpush1.msra.mxu0 0.0
        %1721 = vmatprep.subr.mxu0 0.0
        %1722 = vmatpush1.msra.mxu0 0.0
        %1723 = vmatprep.mubr.f32.mxu0 0.0
        %1724 = vmatmul.mubr.f32.gmra.mrb[0].mxu0 %v1657
        %v1725 = vpop.f32.mrb[0].mxu0
        %v1726 = vadd.f32 0.0, %v1725
        %v1727 = vpop.f32.mrb[0].mxu0
        %1728 = vdwg.mxu0
        %v1729 = vadd.f32 %v1650, %v1726
        %v1730 = vld [vmem:[%s4] sm:$0xff]
        %1732 = vset.pattern.permute.xlu0 0
        %1733 = vperm.xlu0 %1732, %v1730
        %v1734 = vpop.permute.xlu0 %1733
        %v1736 = vadd.f32 %v1729, %v1734
        %v1737 = vmax.f32 %v1736, 0.0
        %vm1738 = vcmask 130048
        %1739 = vst.msk [vmem:[%s237] sm:$0xff] %vm1738, %v1737
        %s1740 = sand.u32 %s153, 1
        %s1741 = scalar_lea.sflag [#allocation4], %s1740
        %s1742 = sand.u32 %s153, 1
        %s1743 = smul.addr %s1742, 8
        %s1744 = scalar_lea.vmem [#allocation3], %s1743
        // Predicated region
        $region45: #{unet_down.1} parent=39 // pred_check
          %p1745 = pneg %p163
        $region46: #{unet_down.1} parent=39 // pred_check_branch
          %1747 = sbr.rel (%p1745) target = $region48
        $region47: #{unet_down.1} parent=39 // pred_region
          %s1749 = ssub.s32 128, 128
          %1750 = vsyncadd %s1741, %s1749
          %s1751 = sadd.s32 %s24, %s23
          %s1752 = smul.addr %s1751, 128
          %s1753 = scalar_lea.hbm %s5, %s1752
          %s1755 = sshll.u32 %s1744, 4
          %s1756 = int_to_ptr.vmem [resolvable:$true] %s1755
          %1758 = dma.vmem_to_hbm [thread:$0]  %s1756, 128, %s1753, %s1741
        $region48: #{unet_down.1} parent=39 // pred_fallthru
          _
      $region40: #{unet_down.1} parent=5 // pred_fallthru
        _
      %p1759 = scmp.le.s32.totalorder 2, %s14
      // Predicated region
      $region49: #{unet_down.1} parent=5 // pred_check
        %p1760 = pneg %p1759
      $region50: #{unet_down.1} parent=5 // pred_check_branch
        %1762 = sbr.rel (%p1760) target = $region52
      $region51: #{unet_down.1} parent=5 // pred_region
        %s1763 = ssub.s32 %s14, 2
        // Predicated region
        $region53: #{unet_down.1} parent=51 // pred_check
          %p1764 = pneg %p169
        $region54: #{unet_down.1} parent=51 // pred_check_branch
          %1766 = sbr.rel (%p1764) target = $region56
        $region55: #{unet_down.1} parent=51 // pred_region
          %s1767 = sand.u32 %s154, 1
          %s1768 = scalar_lea.sflag [#allocation4], %s1767
          %s1769 = sand.u32 %s154, 1
          %s1770 = smul.addr %s1769, 8
          %s1771 = scalar_lea.vmem [#allocation3], %s1770
          %1772 = dma.done %s1768, 128
        $region56: #{unet_down.1} parent=51 // pred_fallthru
          _
      $region52: #{unet_down.1} parent=5 // pred_fallthru
        _
    $region6: #{unet_down.1} parent=1 // loop_footer
      %s18 = sadd.s32 1, %s14
    $region7: #{unet_down.1} parent=1 // loop_footer_branch
      %13 = sbr.rel target = $region3
    $region8: #{unet_down.1} parent=1 // loop_exit
      _
    %1773 = vsyncpa [#allocation4], 1
    %s1774 = scalar_lea.sflag [#allocation4], 1
    %1775 = vsyncpa %s1774, 1

</llo_original>
